<compile_context>
chip_gen: v7x
topology: tpu7x:2x2x1
jax: 0.10.0
libtpu: 0.0.40
codegen_flags: <defaults>
</compile_context>

<pallas_src>
import jax
import jax.numpy as jnp
from jax.experimental import pallas as pl
from jax.experimental.pallas import tpu as pltpu

CHANNELS = 32
NUM_LAYERS = 2
HEADS = 1
NEG_SLOPE = 0.2
LN_EPS = 1e-5

NODE_TYPES = ("user", "item")
EDGE_TYPES = (("user", "buys", "item"), ("item", "rev_buys", "user"))


# ----------------------------- fused Pallas kernel -------------------------- #

def _hetero_gat_fused_kernel(x_user_ref, x_item_ref, adj0_ref, adj1_ref,
                             w_src_ref, att_src_ref, att_dst_ref, bias_ref,
                             ln_w_ref, ln_b_ref,
                             out_user_ref, out_item_ref):
    """Whole HeteroGAT forward (both layers, both edge types) in one kernel.

    Stacked parameter layouts (leading axis indexed with static Python ints,
    so both layers / both edge types reuse the same VMEM-resident buffers):
      w_src_ref   : [L*E, C, C]    per (layer, edge type) source projection
      att_src_ref : [L*E, 1, C]    folded att_src @ W_src^T
      att_dst_ref : [L*E, 1, C]    folded att_dst @ W_dst^T
      bias_ref    : [L*E, 1, C]
      ln_w_ref    : [L*NT, 1, C]   LayerNorm weight per (layer, node type)
      ln_b_ref    : [L*NT, 1, C]
    Adjacency masks are int8, adj[dst, src] != 0 <=> edge exists.
    """
    f32 = jnp.float32
    x = {"user": x_user_ref[...], "item": x_item_ref[...]}
    masks = {EDGE_TYPES[0]: adj0_ref[...] != 0,
             EDGE_TYPES[1]: adj1_ref[...] != 0}

    n_et = len(EDGE_TYPES)
    n_nt = len(NODE_TYPES)

    for layer in range(NUM_LAYERS):
        agg = {}
        for e, edge_type in enumerate(EDGE_TYPES):
            src_t, _, dst_t = edge_type
            idx = layer * n_et + e
            mask = masks[edge_type]                       # [Nd, Ns] bool
            x_src = x[src_t]                              # [Ns, C]
            x_dst = x[dst_t]                              # [Nd, C]

            # source projection (only the src projection feeds the output)
            h_src = jnp.dot(x_src, w_src_ref[idx],
                            preferred_element_type=f32)   # [Ns, C]

            # attention logits via folded projections — no x_dst @ W_dst matmul,
            # no cross-lane reduce; both are tiny MXU matmuls directly on x.
            a_src = jax.lax.dot_general(att_src_ref[idx], x_src,
                                        (((1,), (1,)), ((), ())),
                                        preferred_element_type=f32)  # [1, Ns]
            a_dst = jax.lax.dot_general(x_dst, att_dst_ref[idx],
                                        (((1,), (1,)), ((), ())),
                                        preferred_element_type=f32)  # [Nd, 1]

            logit = a_dst + a_src                          # [Nd, Ns]
            logit = jnp.where(logit > 0, logit, NEG_SLOPE * logit)   # LeakyReLU(0.2)
            logit = jnp.where(mask, logit, jnp.float32(-1e30))

            m = jnp.max(logit, axis=-1, keepdims=True)     # per-dst max
            p = jnp.where(mask, jnp.exp(logit - m), 0.0)
            denom = jnp.sum(p, axis=-1, keepdims=True)
            # EUP approximate reciprocal instead of a VPU divide; rows with no
            # incoming edges have p == 0 so they still reduce to bias only.
            inv = pl.reciprocal(jnp.maximum(denom, 1e-16), approx=True)
            p = p * inv

            out = jnp.dot(p, h_src, preferred_element_type=f32) + bias_ref[idx]
            agg[dst_t] = out if dst_t not in agg else agg[dst_t] + out  # aggr='sum'

        # per-node-type LayerNorm(mode='node') + ReLU
        new_x = {}
        for n, nt in enumerate(NODE_TYPES):
            if nt not in agg:
                continue
            nidx = layer * n_nt + n
            v = agg[nt]
            mean = jnp.mean(v, axis=-1, keepdims=True)
            vc = v - mean
            var = jnp.mean(vc * vc, axis=-1, keepdims=True)
            y = vc * jax.lax.rsqrt(var + LN_EPS) * ln_w_ref[nidx] + ln_b_ref[nidx]
            new_x[nt] = jnp.maximum(y, 0.0)
        x = new_x

    out_user_ref[...] = x["user"]
    out_item_ref[...] = x["item"]


# ------------------------------ pallas_call wrapper -------------------------- #

def _full_spec(shape):
    # single grid point; block == full array (satisfies the (8,128)-or-full rule)
    return pl.BlockSpec(shape, lambda i: (0,) * len(shape))


def _pack_params(params):
    """Fold attention into the weights and stack per-(layer, edge/node type)."""
    w_src, a_src, a_dst, bias, ln_w, ln_b = [], [], [], [], [], []
    for layer in params["layers"]:
        for et in EDGE_TYPES:
            p = layer["convs"][et]
            w_src.append(p["w_src"])
            # <x W, att> == x @ (att @ W^T)^T  -> fold the projection into att.
            a_src.append(p["att_src"] @ p["w_src"].T)   # [1, C]
            a_dst.append(p["att_dst"] @ p["w_dst"].T)   # [1, C]
            bias.append(p["bias"])
        for nt in NODE_TYPES:
            n = layer["norms"][nt]
            ln_w.append(n["weight"])
            ln_b.append(n["bias"])
    return {
        "w_src": jnp.stack(w_src).astype(jnp.float32),     # [L*E, C, C]
        "att_src": jnp.stack(a_src).astype(jnp.float32),   # [L*E, 1, C]
        "att_dst": jnp.stack(a_dst).astype(jnp.float32),   # [L*E, 1, C]
        "bias": jnp.stack(bias).astype(jnp.float32),       # [L*E, 1, C]
        "ln_w": jnp.stack(ln_w).astype(jnp.float32),       # [L*NT, 1, C]
        "ln_b": jnp.stack(ln_b).astype(jnp.float32),       # [L*NT, 1, C]
    }


def hetero_gat_forward(x_dict, adj_dict, params):
    packed = _pack_params(params)
    x_user = x_dict["user"].astype(jnp.float32)
    x_item = x_dict["item"].astype(jnp.float32)
    adj0 = adj_dict[EDGE_TYPES[0]]   # [N_item, N_user] int8
    adj1 = adj_dict[EDGE_TYPES[1]]   # [N_user, N_item] int8
    Nu, C = x_user.shape
    Ni = x_item.shape[0]

    out_user, out_item = pl.pallas_call(
        _hetero_gat_fused_kernel,
        out_shape=(jax.ShapeDtypeStruct((Nu, C), jnp.float32),
                   jax.ShapeDtypeStruct((Ni, C), jnp.float32)),
        grid=(1,),
        in_specs=[
            _full_spec(x_user.shape), _full_spec(x_item.shape),
            _full_spec(adj0.shape), _full_spec(adj1.shape),
            _full_spec(packed["w_src"].shape),
            _full_spec(packed["att_src"].shape),
            _full_spec(packed["att_dst"].shape),
            _full_spec(packed["bias"].shape),
            _full_spec(packed["ln_w"].shape),
            _full_spec(packed["ln_b"].shape),
        ],
        out_specs=(_full_spec((Nu, C)), _full_spec((Ni, C))),
        compiler_params=pltpu.CompilerParams(dimension_semantics=("arbitrary",)),
    )(x_user, x_item, adj0, adj1,
      packed["w_src"], packed["att_src"], packed["att_dst"], packed["bias"],
      packed["ln_w"], packed["ln_b"])

    return {"user": out_user, "item": out_item}


# ------------------------------ params / graph helpers ----------------------- #

def glorot(key, shape):
    fan_in, fan_out = shape[-2], shape[-1]
    limit = (6.0 / (fan_in + fan_out)) ** 0.5
    return jax.random.uniform(key, shape, jnp.float32, -limit, limit)


def init_params(key, node_types, edge_types, channels, num_layers):
    layers = []
    for _ in range(num_layers):
        convs = {}
        for et in edge_types:
            key, k1, k2, k3, k4 = jax.random.split(key, 5)
            convs[et] = {
                "w_src": glorot(k1, (channels, channels)),
                "w_dst": glorot(k2, (channels, channels)),
                "att_src": glorot(k3, (1, channels)),
                "att_dst": glorot(k4, (1, channels)),
                "bias": jnp.zeros((1, channels), jnp.float32),
            }
        norms = {nt: {"weight": jnp.ones((1, channels), jnp.float32),
                      "bias": jnp.zeros((1, channels), jnp.float32)}
                 for nt in node_types}
        layers.append({"convs": convs, "norms": norms})
    return {"layers": layers}


def edge_index_to_adj(edge_index, n_src, n_dst):
    """Dense int8 adjacency mask adj[dst, src] in {0, 1}."""
    src, dst = edge_index[0], edge_index[1]
    adj = jnp.zeros((n_dst, n_src), jnp.int8)
    return adj.at[dst, src].set(1)


def make_unique_edges(key, n_src, n_dst, n_edges):
    # deterministic, duplicate-free edge list
    perm = jax.random.permutation(key, n_src * n_dst)[:n_edges]
    src = perm // n_dst
    dst = perm % n_dst
    return jnp.stack([src, dst]).astype(jnp.int32)


# ------------------------------ main ----------------------------------------- #

if __name__ == "__main__":
    N_USER, N_ITEM, N_EDGES = 16, 24, 40

    key = jax.random.PRNGKey(0)
    k_xu, k_xi, k_e0, k_e1, k_p = jax.random.split(key, 5)

    x_dict = {
        "user": jax.random.normal(k_xu, (N_USER, CHANNELS), jnp.float32),
        "item": jax.random.normal(k_xi, (N_ITEM, CHANNELS), jnp.float32),
    }

    edge_index_dict = {
        EDGE_TYPES[0]: make_unique_edges(k_e0, N_USER, N_ITEM, N_EDGES),
        EDGE_TYPES[1]: make_unique_edges(k_e1, N_ITEM, N_USER, N_EDGES),
    }

    n_nodes = {"user": N_USER, "item": N_ITEM}
    adj_dict = {
        et: edge_index_to_adj(ei, n_nodes[et[0]], n_nodes[et[2]])
        for et, ei in edge_index_dict.items()
    }

    params = init_params(k_p, list(NODE_TYPES), list(EDGE_TYPES), CHANNELS, NUM_LAYERS)

    out_dict = hetero_gat_forward(x_dict, adj_dict, params)
    for v in out_dict.values():
        jax.block_until_ready(v)

    assert out_dict["user"].shape == (N_USER, CHANNELS)
    assert out_dict["item"].shape == (N_ITEM, CHANNELS)
    print("KERNEL_OK")
</pallas_src>

<mosaic_0001>
module attributes {stable_mosaic.version = 11 : i64} {
  func.func @_hetero_gat_fused_kernel(%arg0: i32, %arg1: memref<16x32xf32, #tpu.memory_space<vmem>>, %arg2: memref<24x32xf32, #tpu.memory_space<vmem>>, %arg3: memref<24x16xi8, #tpu.memory_space<vmem>>, %arg4: memref<16x24xi8, #tpu.memory_space<vmem>>, %arg5: memref<4x32x32xf32, #tpu.memory_space<vmem>>, %arg6: memref<4x1x32xf32, #tpu.memory_space<vmem>>, %arg7: memref<4x1x32xf32, #tpu.memory_space<vmem>>, %arg8: memref<4x1x32xf32, #tpu.memory_space<vmem>>, %arg9: memref<4x1x32xf32, #tpu.memory_space<vmem>>, %arg10: memref<4x1x32xf32, #tpu.memory_space<vmem>>, %arg11: memref<16x32xf32, #tpu.memory_space<vmem>>, %arg12: memref<24x32xf32, #tpu.memory_space<vmem>>) attributes {dimension_semantics = [#tpu.dimension_semantics<arbitrary>], iteration_bounds = array<i64: 1>, scalar_prefetch = 0 : i64, scratch_operands = 0 : i64, tpu.core_type = #tpu.core_type<tc>, window_params = [{pipeline_mode = #tpu.pipeline_mode<synchronous>, transform_indices = @transform_0, window_bounds = array<i64: 16, 32>}, {pipeline_mode = #tpu.pipeline_mode<synchronous>, transform_indices = @transform_1, window_bounds = array<i64: 24, 32>}, {pipeline_mode = #tpu.pipeline_mode<synchronous>, transform_indices = @transform_2, window_bounds = array<i64: 24, 16>}, {pipeline_mode = #tpu.pipeline_mode<synchronous>, transform_indices = @transform_3, window_bounds = array<i64: 16, 24>}, {pipeline_mode = #tpu.pipeline_mode<synchronous>, transform_indices = @transform_4, window_bounds = array<i64: 4, 32, 32>}, {pipeline_mode = #tpu.pipeline_mode<synchronous>, transform_indices = @transform_5, window_bounds = array<i64: 4, 1, 32>}, {pipeline_mode = #tpu.pipeline_mode<synchronous>, transform_indices = @transform_6, window_bounds = array<i64: 4, 1, 32>}, {pipeline_mode = #tpu.pipeline_mode<synchronous>, transform_indices = @transform_7, window_bounds = array<i64: 4, 1, 32>}, {pipeline_mode = #tpu.pipeline_mode<synchronous>, transform_indices = @transform_8, window_bounds = array<i64: 4, 1, 32>}, {pipeline_mode = #tpu.pipeline_mode<synchronous>, transform_indices = @transform_9, window_bounds = array<i64: 4, 1, 32>}, {pipeline_mode = #tpu.pipeline_mode<synchronous>, transform_indices = @transform_10, window_bounds = array<i64: 16, 32>}, {pipeline_mode = #tpu.pipeline_mode<synchronous>, transform_indices = @transform_11, window_bounds = array<i64: 24, 32>}]} {
    %c0 = arith.constant 0 : index
    %c0_0 = arith.constant 0 : index
    %0 = vector.load %arg1[%c0, %c0_0] : memref<16x32xf32, #tpu.memory_space<vmem>>, vector<16x32xf32>
    %c0_1 = arith.constant 0 : index
    %c0_2 = arith.constant 0 : index
    %1 = vector.load %arg2[%c0_1, %c0_2] : memref<24x32xf32, #tpu.memory_space<vmem>>, vector<24x32xf32>
    %c0_3 = arith.constant 0 : index
    %c0_4 = arith.constant 0 : index
    %2 = vector.load %arg3[%c0_3, %c0_4] : memref<24x16xi8, #tpu.memory_space<vmem>>, vector<24x16xi8>
    %c0_i8 = arith.constant 0 : i8
    %3 = vector.broadcast %c0_i8 : i8 to vector<24x16xi8>
    %4 = arith.cmpi ne, %2, %3 : vector<24x16xi8>
    %c0_5 = arith.constant 0 : index
    %c0_6 = arith.constant 0 : index
    %5 = vector.load %arg4[%c0_5, %c0_6] : memref<16x24xi8, #tpu.memory_space<vmem>>, vector<16x24xi8>
    %c0_i8_7 = arith.constant 0 : i8
    %6 = vector.broadcast %c0_i8_7 : i8 to vector<16x24xi8>
    %7 = arith.cmpi ne, %5, %6 : vector<16x24xi8>
    %c0_8 = arith.constant 0 : index
    %c0_9 = arith.constant 0 : index
    %c0_10 = arith.constant 0 : index
    %8 = vector.load %arg5[%c0_8, %c0_9, %c0_10] : memref<4x32x32xf32, #tpu.memory_space<vmem>>, vector<1x32x32xf32>
    %9 = vector.shape_cast %8 : vector<1x32x32xf32> to vector<32x32xf32>
    %cst = arith.constant dense<0.000000e+00> : vector<16x32xf32>
    %10 = tpu.matmul %0, %9, %cst {dimension_numbers = #tpu.dot_dimension_numbers<[1], [0], [0], [1], [0, 0, 1, 1], [], []>} : vector<16x32xf32>, vector<32x32xf32>, vector<16x32xf32> -> vector<16x32xf32>
    %c0_11 = arith.constant 0 : index
    %c0_12 = arith.constant 0 : index
    %c0_13 = arith.constant 0 : index
    %11 = vector.load %arg6[%c0_11, %c0_12, %c0_13] : memref<4x1x32xf32, #tpu.memory_space<vmem>>, vector<1x1x32xf32>
    %12 = vector.shape_cast %11 : vector<1x1x32xf32> to vector<1x32xf32>
    %cst_14 = arith.constant dense<0.000000e+00> : vector<1x16xf32>
    %13 = tpu.matmul %12, %0, %cst_14 {dimension_numbers = #tpu.dot_dimension_numbers<[1], [1], [0], [0], [0, 0, 1, 0], [], []>} : vector<1x32xf32>, vector<16x32xf32>, vector<1x16xf32> -> vector<1x16xf32>
    %c0_15 = arith.constant 0 : index
    %c0_16 = arith.constant 0 : index
    %c0_17 = arith.constant 0 : index
    %14 = vector.load %arg7[%c0_15, %c0_16, %c0_17] : memref<4x1x32xf32, #tpu.memory_space<vmem>>, vector<1x1x32xf32>
    %15 = vector.shape_cast %14 : vector<1x1x32xf32> to vector<1x32xf32>
    %cst_18 = arith.constant dense<0.000000e+00> : vector<24x1xf32>
    %16 = tpu.matmul %1, %15, %cst_18 {dimension_numbers = #tpu.dot_dimension_numbers<[1], [1], [0], [0], [0, 0, 1, 0], [], []>} : vector<24x32xf32>, vector<1x32xf32>, vector<24x1xf32> -> vector<24x1xf32>
    %17 = vector.broadcast %16 : vector<24x1xf32> to vector<24x16xf32>
    %18 = vector.broadcast %13 : vector<1x16xf32> to vector<24x16xf32>
    %19 = arith.addf %17, %18 : vector<24x16xf32>
    %cst_19 = arith.constant 0.000000e+00 : f32
    %20 = vector.broadcast %cst_19 : f32 to vector<24x16xf32>
    %21 = arith.cmpf ogt, %19, %20 : vector<24x16xf32>
    %cst_20 = arith.constant 2.000000e-01 : f32
    %22 = vector.broadcast %cst_20 : f32 to vector<24x16xf32>
    %23 = arith.mulf %22, %19 : vector<24x16xf32>
    %24 = arith.select %21, %19, %23 : vector<24x16xi1>, vector<24x16xf32>
    %cst_21 = arith.constant -1.000000e+30 : f32
    %25 = vector.broadcast %cst_21 : f32 to vector<24x16xf32>
    %26 = arith.select %4, %24, %25 : vector<24x16xi1>, vector<24x16xf32>
    %cst_22 = arith.constant dense<0xFF800000> : vector<24xf32>
    %27 = vector.multi_reduction <maximumf>, %26, %cst_22 [1] : vector<24x16xf32> to vector<24xf32>
    %28 = vector.shape_cast %27 : vector<24xf32> to vector<24x1xf32>
    %29 = vector.broadcast %28 : vector<24x1xf32> to vector<24x16xf32>
    %30 = arith.subf %26, %29 : vector<24x16xf32>
    %31 = math.exp %30 : vector<24x16xf32>
    %cst_23 = arith.constant 0.000000e+00 : f32
    %32 = vector.broadcast %cst_23 : f32 to vector<24x16xf32>
    %33 = arith.select %4, %31, %32 : vector<24x16xi1>, vector<24x16xf32>
    %cst_24 = arith.constant dense<0.000000e+00> : vector<24xf32>
    %34 = vector.multi_reduction <add>, %33, %cst_24 [1] : vector<24x16xf32> to vector<24xf32>
    %35 = vector.shape_cast %34 : vector<24xf32> to vector<24x1xf32>
    %cst_25 = arith.constant 1.000000e-16 : f32
    %36 = vector.broadcast %cst_25 : f32 to vector<24x1xf32>
    %37 = arith.maximumf %35, %36 : vector<24x1xf32>
    %38 = tpu.reciprocal %37 {approx = true} : vector<24x1xf32> -> vector<24x1xf32>
    %39 = vector.broadcast %38 : vector<24x1xf32> to vector<24x16xf32>
    %40 = arith.mulf %33, %39 : vector<24x16xf32>
    %cst_26 = arith.constant dense<0.000000e+00> : vector<24x32xf32>
    %41 = tpu.matmul %40, %10, %cst_26 {dimension_numbers = #tpu.dot_dimension_numbers<[1], [0], [0], [1], [0, 0, 1, 1], [], []>} : vector<24x16xf32>, vector<16x32xf32>, vector<24x32xf32> -> vector<24x32xf32>
    %c0_27 = arith.constant 0 : index
    %c0_28 = arith.constant 0 : index
    %c0_29 = arith.constant 0 : index
    %42 = vector.load %arg8[%c0_27, %c0_28, %c0_29] : memref<4x1x32xf32, #tpu.memory_space<vmem>>, vector<1x1x32xf32>
    %43 = vector.shape_cast %42 : vector<1x1x32xf32> to vector<1x32xf32>
    %44 = vector.broadcast %43 : vector<1x32xf32> to vector<24x32xf32>
    %45 = arith.addf %41, %44 : vector<24x32xf32>
    %c1 = arith.constant 1 : index
    %c0_30 = arith.constant 0 : index
    %c0_31 = arith.constant 0 : index
    %46 = vector.load %arg5[%c1, %c0_30, %c0_31] : memref<4x32x32xf32, #tpu.memory_space<vmem>>, vector<1x32x32xf32>
    %47 = vector.shape_cast %46 : vector<1x32x32xf32> to vector<32x32xf32>
    %cst_32 = arith.constant dense<0.000000e+00> : vector<24x32xf32>
    %48 = tpu.matmul %1, %47, %cst_32 {dimension_numbers = #tpu.dot_dimension_numbers<[1], [0], [0], [1], [0, 0, 1, 1], [], []>} : vector<24x32xf32>, vector<32x32xf32>, vector<24x32xf32> -> vector<24x32xf32>
    %c1_33 = arith.constant 1 : index
    %c0_34 = arith.constant 0 : index
    %c0_35 = arith.constant 0 : index
    %49 = vector.load %arg6[%c1_33, %c0_34, %c0_35] : memref<4x1x32xf32, #tpu.memory_space<vmem>>, vector<1x1x32xf32>
    %50 = vector.shape_cast %49 : vector<1x1x32xf32> to vector<1x32xf32>
    %cst_36 = arith.constant dense<0.000000e+00> : vector<1x24xf32>
    %51 = tpu.matmul %50, %1, %cst_36 {dimension_numbers = #tpu.dot_dimension_numbers<[1], [1], [0], [0], [0, 0, 1, 0], [], []>} : vector<1x32xf32>, vector<24x32xf32>, vector<1x24xf32> -> vector<1x24xf32>
    %c1_37 = arith.constant 1 : index
    %c0_38 = arith.constant 0 : index
    %c0_39 = arith.constant 0 : index
    %52 = vector.load %arg7[%c1_37, %c0_38, %c0_39] : memref<4x1x32xf32, #tpu.memory_space<vmem>>, vector<1x1x32xf32>
    %53 = vector.shape_cast %52 : vector<1x1x32xf32> to vector<1x32xf32>
    %cst_40 = arith.constant dense<0.000000e+00> : vector<16x1xf32>
    %54 = tpu.matmul %0, %53, %cst_40 {dimension_numbers = #tpu.dot_dimension_numbers<[1], [1], [0], [0], [0, 0, 1, 0], [], []>} : vector<16x32xf32>, vector<1x32xf32>, vector<16x1xf32> -> vector<16x1xf32>
    %55 = vector.broadcast %54 : vector<16x1xf32> to vector<16x24xf32>
    %56 = vector.broadcast %51 : vector<1x24xf32> to vector<16x24xf32>
    %57 = arith.addf %55, %56 : vector<16x24xf32>
    %cst_41 = arith.constant 0.000000e+00 : f32
    %58 = vector.broadcast %cst_41 : f32 to vector<16x24xf32>
    %59 = arith.cmpf ogt, %57, %58 : vector<16x24xf32>
    %cst_42 = arith.constant 2.000000e-01 : f32
    %60 = vector.broadcast %cst_42 : f32 to vector<16x24xf32>
    %61 = arith.mulf %60, %57 : vector<16x24xf32>
    %62 = arith.select %59, %57, %61 : vector<16x24xi1>, vector<16x24xf32>
    %cst_43 = arith.constant -1.000000e+30 : f32
    %63 = vector.broadcast %cst_43 : f32 to vector<16x24xf32>
    %64 = arith.select %7, %62, %63 : vector<16x24xi1>, vector<16x24xf32>
    %cst_44 = arith.constant dense<0xFF800000> : vector<16xf32>
    %65 = vector.multi_reduction <maximumf>, %64, %cst_44 [1] : vector<16x24xf32> to vector<16xf32>
    %66 = vector.shape_cast %65 : vector<16xf32> to vector<16x1xf32>
    %67 = vector.broadcast %66 : vector<16x1xf32> to vector<16x24xf32>
    %68 = arith.subf %64, %67 : vector<16x24xf32>
    %69 = math.exp %68 : vector<16x24xf32>
    %cst_45 = arith.constant 0.000000e+00 : f32
    %70 = vector.broadcast %cst_45 : f32 to vector<16x24xf32>
    %71 = arith.select %7, %69, %70 : vector<16x24xi1>, vector<16x24xf32>
    %cst_46 = arith.constant dense<0.000000e+00> : vector<16xf32>
    %72 = vector.multi_reduction <add>, %71, %cst_46 [1] : vector<16x24xf32> to vector<16xf32>
    %73 = vector.shape_cast %72 : vector<16xf32> to vector<16x1xf32>
    %cst_47 = arith.constant 1.000000e-16 : f32
    %74 = vector.broadcast %cst_47 : f32 to vector<16x1xf32>
    %75 = arith.maximumf %73, %74 : vector<16x1xf32>
    %76 = tpu.reciprocal %75 {approx = true} : vector<16x1xf32> -> vector<16x1xf32>
    %77 = vector.broadcast %76 : vector<16x1xf32> to vector<16x24xf32>
    %78 = arith.mulf %71, %77 : vector<16x24xf32>
    %cst_48 = arith.constant dense<0.000000e+00> : vector<16x32xf32>
    %79 = tpu.matmul %78, %48, %cst_48 {dimension_numbers = #tpu.dot_dimension_numbers<[1], [0], [0], [1], [0, 0, 1, 1], [], []>} : vector<16x24xf32>, vector<24x32xf32>, vector<16x32xf32> -> vector<16x32xf32>
    %c1_49 = arith.constant 1 : index
    %c0_50 = arith.constant 0 : index
    %c0_51 = arith.constant 0 : index
    %80 = vector.load %arg8[%c1_49, %c0_50, %c0_51] : memref<4x1x32xf32, #tpu.memory_space<vmem>>, vector<1x1x32xf32>
    %81 = vector.shape_cast %80 : vector<1x1x32xf32> to vector<1x32xf32>
    %82 = vector.broadcast %81 : vector<1x32xf32> to vector<16x32xf32>
    %83 = arith.addf %79, %82 : vector<16x32xf32>
    %cst_52 = arith.constant dense<0.000000e+00> : vector<16xf32>
    %84 = vector.multi_reduction <add>, %83, %cst_52 [1] : vector<16x32xf32> to vector<16xf32>
    %85 = vector.shape_cast %84 : vector<16xf32> to vector<16x1xf32>
    %cst_53 = arith.constant 3.200000e+01 : f32
    %86 = vector.broadcast %cst_53 : f32 to vector<16x1xf32>
    %87 = arith.divf %85, %86 : vector<16x1xf32>
    %88 = vector.broadcast %87 : vector<16x1xf32> to vector<16x32xf32>
    %89 = arith.subf %83, %88 : vector<16x32xf32>
    %90 = arith.mulf %89, %89 : vector<16x32xf32>
    %cst_54 = arith.constant dense<0.000000e+00> : vector<16xf32>
    %91 = vector.multi_reduction <add>, %90, %cst_54 [1] : vector<16x32xf32> to vector<16xf32>
    %92 = vector.shape_cast %91 : vector<16xf32> to vector<16x1xf32>
    %cst_55 = arith.constant 3.200000e+01 : f32
    %93 = vector.broadcast %cst_55 : f32 to vector<16x1xf32>
    %94 = arith.divf %92, %93 : vector<16x1xf32>
    %cst_56 = arith.constant 9.99999974E-6 : f32
    %95 = vector.broadcast %cst_56 : f32 to vector<16x1xf32>
    %96 = arith.addf %94, %95 : vector<16x1xf32>
    %97 = math.rsqrt %96 : vector<16x1xf32>
    %98 = vector.broadcast %97 : vector<16x1xf32> to vector<16x32xf32>
    %99 = arith.mulf %89, %98 : vector<16x32xf32>
    %c0_57 = arith.constant 0 : index
    %c0_58 = arith.constant 0 : index
    %c0_59 = arith.constant 0 : index
    %100 = vector.load %arg9[%c0_57, %c0_58, %c0_59] : memref<4x1x32xf32, #tpu.memory_space<vmem>>, vector<1x1x32xf32>
    %101 = vector.shape_cast %100 : vector<1x1x32xf32> to vector<1x32xf32>
    %102 = vector.broadcast %101 : vector<1x32xf32> to vector<16x32xf32>
    %103 = arith.mulf %99, %102 : vector<16x32xf32>
    %c0_60 = arith.constant 0 : index
    %c0_61 = arith.constant 0 : index
    %c0_62 = arith.constant 0 : index
    %104 = vector.load %arg10[%c0_60, %c0_61, %c0_62] : memref<4x1x32xf32, #tpu.memory_space<vmem>>, vector<1x1x32xf32>
    %105 = vector.shape_cast %104 : vector<1x1x32xf32> to vector<1x32xf32>
    %106 = vector.broadcast %105 : vector<1x32xf32> to vector<16x32xf32>
    %107 = arith.addf %103, %106 : vector<16x32xf32>
    %cst_63 = arith.constant 0.000000e+00 : f32
    %108 = vector.broadcast %cst_63 : f32 to vector<16x32xf32>
    %109 = arith.maximumf %107, %108 : vector<16x32xf32>
    %cst_64 = arith.constant dense<0.000000e+00> : vector<24xf32>
    %110 = vector.multi_reduction <add>, %45, %cst_64 [1] : vector<24x32xf32> to vector<24xf32>
    %111 = vector.shape_cast %110 : vector<24xf32> to vector<24x1xf32>
    %cst_65 = arith.constant 3.200000e+01 : f32
    %112 = vector.broadcast %cst_65 : f32 to vector<24x1xf32>
    %113 = arith.divf %111, %112 : vector<24x1xf32>
    %114 = vector.broadcast %113 : vector<24x1xf32> to vector<24x32xf32>
    %115 = arith.subf %45, %114 : vector<24x32xf32>
    %116 = arith.mulf %115, %115 : vector<24x32xf32>
    %cst_66 = arith.constant dense<0.000000e+00> : vector<24xf32>
    %117 = vector.multi_reduction <add>, %116, %cst_66 [1] : vector<24x32xf32> to vector<24xf32>
    %118 = vector.shape_cast %117 : vector<24xf32> to vector<24x1xf32>
    %cst_67 = arith.constant 3.200000e+01 : f32
    %119 = vector.broadcast %cst_67 : f32 to vector<24x1xf32>
    %120 = arith.divf %118, %119 : vector<24x1xf32>
    %cst_68 = arith.constant 9.99999974E-6 : f32
    %121 = vector.broadcast %cst_68 : f32 to vector<24x1xf32>
    %122 = arith.addf %120, %121 : vector<24x1xf32>
    %123 = math.rsqrt %122 : vector<24x1xf32>
    %124 = vector.broadcast %123 : vector<24x1xf32> to vector<24x32xf32>
    %125 = arith.mulf %115, %124 : vector<24x32xf32>
    %c1_69 = arith.constant 1 : index
    %c0_70 = arith.constant 0 : index
    %c0_71 = arith.constant 0 : index
    %126 = vector.load %arg9[%c1_69, %c0_70, %c0_71] : memref<4x1x32xf32, #tpu.memory_space<vmem>>, vector<1x1x32xf32>
    %127 = vector.shape_cast %126 : vector<1x1x32xf32> to vector<1x32xf32>
    %128 = vector.broadcast %127 : vector<1x32xf32> to vector<24x32xf32>
    %129 = arith.mulf %125, %128 : vector<24x32xf32>
    %c1_72 = arith.constant 1 : index
    %c0_73 = arith.constant 0 : index
    %c0_74 = arith.constant 0 : index
    %130 = vector.load %arg10[%c1_72, %c0_73, %c0_74] : memref<4x1x32xf32, #tpu.memory_space<vmem>>, vector<1x1x32xf32>
    %131 = vector.shape_cast %130 : vector<1x1x32xf32> to vector<1x32xf32>
    %132 = vector.broadcast %131 : vector<1x32xf32> to vector<24x32xf32>
    %133 = arith.addf %129, %132 : vector<24x32xf32>
    %cst_75 = arith.constant 0.000000e+00 : f32
    %134 = vector.broadcast %cst_75 : f32 to vector<24x32xf32>
    %135 = arith.maximumf %133, %134 : vector<24x32xf32>
    %c2 = arith.constant 2 : index
    %c0_76 = arith.constant 0 : index
    %c0_77 = arith.constant 0 : index
    %136 = vector.load %arg5[%c2, %c0_76, %c0_77] : memref<4x32x32xf32, #tpu.memory_space<vmem>>, vector<1x32x32xf32>
    %137 = vector.shape_cast %136 : vector<1x32x32xf32> to vector<32x32xf32>
    %cst_78 = arith.constant dense<0.000000e+00> : vector<16x32xf32>
    %138 = tpu.matmul %109, %137, %cst_78 {dimension_numbers = #tpu.dot_dimension_numbers<[1], [0], [0], [1], [0, 0, 1, 1], [], []>} : vector<16x32xf32>, vector<32x32xf32>, vector<16x32xf32> -> vector<16x32xf32>
    %c2_79 = arith.constant 2 : index
    %c0_80 = arith.constant 0 : index
    %c0_81 = arith.constant 0 : index
    %139 = vector.load %arg6[%c2_79, %c0_80, %c0_81] : memref<4x1x32xf32, #tpu.memory_space<vmem>>, vector<1x1x32xf32>
    %140 = vector.shape_cast %139 : vector<1x1x32xf32> to vector<1x32xf32>
    %cst_82 = arith.constant dense<0.000000e+00> : vector<1x16xf32>
    %141 = tpu.matmul %140, %109, %cst_82 {dimension_numbers = #tpu.dot_dimension_numbers<[1], [1], [0], [0], [0, 0, 1, 0], [], []>} : vector<1x32xf32>, vector<16x32xf32>, vector<1x16xf32> -> vector<1x16xf32>
    %c2_83 = arith.constant 2 : index
    %c0_84 = arith.constant 0 : index
    %c0_85 = arith.constant 0 : index
    %142 = vector.load %arg7[%c2_83, %c0_84, %c0_85] : memref<4x1x32xf32, #tpu.memory_space<vmem>>, vector<1x1x32xf32>
    %143 = vector.shape_cast %142 : vector<1x1x32xf32> to vector<1x32xf32>
    %cst_86 = arith.constant dense<0.000000e+00> : vector<24x1xf32>
    %144 = tpu.matmul %135, %143, %cst_86 {dimension_numbers = #tpu.dot_dimension_numbers<[1], [1], [0], [0], [0, 0, 1, 0], [], []>} : vector<24x32xf32>, vector<1x32xf32>, vector<24x1xf32> -> vector<24x1xf32>
    %145 = vector.broadcast %144 : vector<24x1xf32> to vector<24x16xf32>
    %146 = vector.broadcast %141 : vector<1x16xf32> to vector<24x16xf32>
    %147 = arith.addf %145, %146 : vector<24x16xf32>
    %cst_87 = arith.constant 0.000000e+00 : f32
    %148 = vector.broadcast %cst_87 : f32 to vector<24x16xf32>
    %149 = arith.cmpf ogt, %147, %148 : vector<24x16xf32>
    %cst_88 = arith.constant 2.000000e-01 : f32
    %150 = vector.broadcast %cst_88 : f32 to vector<24x16xf32>
    %151 = arith.mulf %150, %147 : vector<24x16xf32>
    %152 = arith.select %149, %147, %151 : vector<24x16xi1>, vector<24x16xf32>
    %cst_89 = arith.constant -1.000000e+30 : f32
    %153 = vector.broadcast %cst_89 : f32 to vector<24x16xf32>
    %154 = arith.select %4, %152, %153 : vector<24x16xi1>, vector<24x16xf32>
    %cst_90 = arith.constant dense<0xFF800000> : vector<24xf32>
    %155 = vector.multi_reduction <maximumf>, %154, %cst_90 [1] : vector<24x16xf32> to vector<24xf32>
    %156 = vector.shape_cast %155 : vector<24xf32> to vector<24x1xf32>
    %157 = vector.broadcast %156 : vector<24x1xf32> to vector<24x16xf32>
    %158 = arith.subf %154, %157 : vector<24x16xf32>
    %159 = math.exp %158 : vector<24x16xf32>
    %cst_91 = arith.constant 0.000000e+00 : f32
    %160 = vector.broadcast %cst_91 : f32 to vector<24x16xf32>
    %161 = arith.select %4, %159, %160 : vector<24x16xi1>, vector<24x16xf32>
    %cst_92 = arith.constant dense<0.000000e+00> : vector<24xf32>
    %162 = vector.multi_reduction <add>, %161, %cst_92 [1] : vector<24x16xf32> to vector<24xf32>
    %163 = vector.shape_cast %162 : vector<24xf32> to vector<24x1xf32>
    %cst_93 = arith.constant 1.000000e-16 : f32
    %164 = vector.broadcast %cst_93 : f32 to vector<24x1xf32>
    %165 = arith.maximumf %163, %164 : vector<24x1xf32>
    %166 = tpu.reciprocal %165 {approx = true} : vector<24x1xf32> -> vector<24x1xf32>
    %167 = vector.broadcast %166 : vector<24x1xf32> to vector<24x16xf32>
    %168 = arith.mulf %161, %167 : vector<24x16xf32>
    %cst_94 = arith.constant dense<0.000000e+00> : vector<24x32xf32>
    %169 = tpu.matmul %168, %138, %cst_94 {dimension_numbers = #tpu.dot_dimension_numbers<[1], [0], [0], [1], [0, 0, 1, 1], [], []>} : vector<24x16xf32>, vector<16x32xf32>, vector<24x32xf32> -> vector<24x32xf32>
    %c2_95 = arith.constant 2 : index
    %c0_96 = arith.constant 0 : index
    %c0_97 = arith.constant 0 : index
    %170 = vector.load %arg8[%c2_95, %c0_96, %c0_97] : memref<4x1x32xf32, #tpu.memory_space<vmem>>, vector<1x1x32xf32>
    %171 = vector.shape_cast %170 : vector<1x1x32xf32> to vector<1x32xf32>
    %172 = vector.broadcast %171 : vector<1x32xf32> to vector<24x32xf32>
    %173 = arith.addf %169, %172 : vector<24x32xf32>
    %c3 = arith.constant 3 : index
    %c0_98 = arith.constant 0 : index
    %c0_99 = arith.constant 0 : index
    %174 = vector.load %arg5[%c3, %c0_98, %c0_99] : memref<4x32x32xf32, #tpu.memory_space<vmem>>, vector<1x32x32xf32>
    %175 = vector.shape_cast %174 : vector<1x32x32xf32> to vector<32x32xf32>
    %cst_100 = arith.constant dense<0.000000e+00> : vector<24x32xf32>
    %176 = tpu.matmul %135, %175, %cst_100 {dimension_numbers = #tpu.dot_dimension_numbers<[1], [0], [0], [1], [0, 0, 1, 1], [], []>} : vector<24x32xf32>, vector<32x32xf32>, vector<24x32xf32> -> vector<24x32xf32>
    %c3_101 = arith.constant 3 : index
    %c0_102 = arith.constant 0 : index
    %c0_103 = arith.constant 0 : index
    %177 = vector.load %arg6[%c3_101, %c0_102, %c0_103] : memref<4x1x32xf32, #tpu.memory_space<vmem>>, vector<1x1x32xf32>
    %178 = vector.shape_cast %177 : vector<1x1x32xf32> to vector<1x32xf32>
    %cst_104 = arith.constant dense<0.000000e+00> : vector<1x24xf32>
    %179 = tpu.matmul %178, %135, %cst_104 {dimension_numbers = #tpu.dot_dimension_numbers<[1], [1], [0], [0], [0, 0, 1, 0], [], []>} : vector<1x32xf32>, vector<24x32xf32>, vector<1x24xf32> -> vector<1x24xf32>
    %c3_105 = arith.constant 3 : index
    %c0_106 = arith.constant 0 : index
    %c0_107 = arith.constant 0 : index
    %180 = vector.load %arg7[%c3_105, %c0_106, %c0_107] : memref<4x1x32xf32, #tpu.memory_space<vmem>>, vector<1x1x32xf32>
    %181 = vector.shape_cast %180 : vector<1x1x32xf32> to vector<1x32xf32>
    %cst_108 = arith.constant dense<0.000000e+00> : vector<16x1xf32>
    %182 = tpu.matmul %109, %181, %cst_108 {dimension_numbers = #tpu.dot_dimension_numbers<[1], [1], [0], [0], [0, 0, 1, 0], [], []>} : vector<16x32xf32>, vector<1x32xf32>, vector<16x1xf32> -> vector<16x1xf32>
    %183 = vector.broadcast %182 : vector<16x1xf32> to vector<16x24xf32>
    %184 = vector.broadcast %179 : vector<1x24xf32> to vector<16x24xf32>
    %185 = arith.addf %183, %184 : vector<16x24xf32>
    %cst_109 = arith.constant 0.000000e+00 : f32
    %186 = vector.broadcast %cst_109 : f32 to vector<16x24xf32>
    %187 = arith.cmpf ogt, %185, %186 : vector<16x24xf32>
    %cst_110 = arith.constant 2.000000e-01 : f32
    %188 = vector.broadcast %cst_110 : f32 to vector<16x24xf32>
    %189 = arith.mulf %188, %185 : vector<16x24xf32>
    %190 = arith.select %187, %185, %189 : vector<16x24xi1>, vector<16x24xf32>
    %cst_111 = arith.constant -1.000000e+30 : f32
    %191 = vector.broadcast %cst_111 : f32 to vector<16x24xf32>
    %192 = arith.select %7, %190, %191 : vector<16x24xi1>, vector<16x24xf32>
    %cst_112 = arith.constant dense<0xFF800000> : vector<16xf32>
    %193 = vector.multi_reduction <maximumf>, %192, %cst_112 [1] : vector<16x24xf32> to vector<16xf32>
    %194 = vector.shape_cast %193 : vector<16xf32> to vector<16x1xf32>
    %195 = vector.broadcast %194 : vector<16x1xf32> to vector<16x24xf32>
    %196 = arith.subf %192, %195 : vector<16x24xf32>
    %197 = math.exp %196 : vector<16x24xf32>
    %cst_113 = arith.constant 0.000000e+00 : f32
    %198 = vector.broadcast %cst_113 : f32 to vector<16x24xf32>
    %199 = arith.select %7, %197, %198 : vector<16x24xi1>, vector<16x24xf32>
    %cst_114 = arith.constant dense<0.000000e+00> : vector<16xf32>
    %200 = vector.multi_reduction <add>, %199, %cst_114 [1] : vector<16x24xf32> to vector<16xf32>
    %201 = vector.shape_cast %200 : vector<16xf32> to vector<16x1xf32>
    %cst_115 = arith.constant 1.000000e-16 : f32
    %202 = vector.broadcast %cst_115 : f32 to vector<16x1xf32>
    %203 = arith.maximumf %201, %202 : vector<16x1xf32>
    %204 = tpu.reciprocal %203 {approx = true} : vector<16x1xf32> -> vector<16x1xf32>
    %205 = vector.broadcast %204 : vector<16x1xf32> to vector<16x24xf32>
    %206 = arith.mulf %199, %205 : vector<16x24xf32>
    %cst_116 = arith.constant dense<0.000000e+00> : vector<16x32xf32>
    %207 = tpu.matmul %206, %176, %cst_116 {dimension_numbers = #tpu.dot_dimension_numbers<[1], [0], [0], [1], [0, 0, 1, 1], [], []>} : vector<16x24xf32>, vector<24x32xf32>, vector<16x32xf32> -> vector<16x32xf32>
    %c3_117 = arith.constant 3 : index
    %c0_118 = arith.constant 0 : index
    %c0_119 = arith.constant 0 : index
    %208 = vector.load %arg8[%c3_117, %c0_118, %c0_119] : memref<4x1x32xf32, #tpu.memory_space<vmem>>, vector<1x1x32xf32>
    %209 = vector.shape_cast %208 : vector<1x1x32xf32> to vector<1x32xf32>
    %210 = vector.broadcast %209 : vector<1x32xf32> to vector<16x32xf32>
    %211 = arith.addf %207, %210 : vector<16x32xf32>
    %cst_120 = arith.constant dense<0.000000e+00> : vector<16xf32>
    %212 = vector.multi_reduction <add>, %211, %cst_120 [1] : vector<16x32xf32> to vector<16xf32>
    %213 = vector.shape_cast %212 : vector<16xf32> to vector<16x1xf32>
    %cst_121 = arith.constant 3.200000e+01 : f32
    %214 = vector.broadcast %cst_121 : f32 to vector<16x1xf32>
    %215 = arith.divf %213, %214 : vector<16x1xf32>
    %216 = vector.broadcast %215 : vector<16x1xf32> to vector<16x32xf32>
    %217 = arith.subf %211, %216 : vector<16x32xf32>
    %218 = arith.mulf %217, %217 : vector<16x32xf32>
    %cst_122 = arith.constant dense<0.000000e+00> : vector<16xf32>
    %219 = vector.multi_reduction <add>, %218, %cst_122 [1] : vector<16x32xf32> to vector<16xf32>
    %220 = vector.shape_cast %219 : vector<16xf32> to vector<16x1xf32>
    %cst_123 = arith.constant 3.200000e+01 : f32
    %221 = vector.broadcast %cst_123 : f32 to vector<16x1xf32>
    %222 = arith.divf %220, %221 : vector<16x1xf32>
    %cst_124 = arith.constant 9.99999974E-6 : f32
    %223 = vector.broadcast %cst_124 : f32 to vector<16x1xf32>
    %224 = arith.addf %222, %223 : vector<16x1xf32>
    %225 = math.rsqrt %224 : vector<16x1xf32>
    %226 = vector.broadcast %225 : vector<16x1xf32> to vector<16x32xf32>
    %227 = arith.mulf %217, %226 : vector<16x32xf32>
    %c2_125 = arith.constant 2 : index
    %c0_126 = arith.constant 0 : index
    %c0_127 = arith.constant 0 : index
    %228 = vector.load %arg9[%c2_125, %c0_126, %c0_127] : memref<4x1x32xf32, #tpu.memory_space<vmem>>, vector<1x1x32xf32>
    %229 = vector.shape_cast %228 : vector<1x1x32xf32> to vector<1x32xf32>
    %230 = vector.broadcast %229 : vector<1x32xf32> to vector<16x32xf32>
    %231 = arith.mulf %227, %230 : vector<16x32xf32>
    %c2_128 = arith.constant 2 : index
    %c0_129 = arith.constant 0 : index
    %c0_130 = arith.constant 0 : index
    %232 = vector.load %arg10[%c2_128, %c0_129, %c0_130] : memref<4x1x32xf32, #tpu.memory_space<vmem>>, vector<1x1x32xf32>
    %233 = vector.shape_cast %232 : vector<1x1x32xf32> to vector<1x32xf32>
    %234 = vector.broadcast %233 : vector<1x32xf32> to vector<16x32xf32>
    %235 = arith.addf %231, %234 : vector<16x32xf32>
    %cst_131 = arith.constant 0.000000e+00 : f32
    %236 = vector.broadcast %cst_131 : f32 to vector<16x32xf32>
    %237 = arith.maximumf %235, %236 : vector<16x32xf32>
    %cst_132 = arith.constant dense<0.000000e+00> : vector<24xf32>
    %238 = vector.multi_reduction <add>, %173, %cst_132 [1] : vector<24x32xf32> to vector<24xf32>
    %239 = vector.shape_cast %238 : vector<24xf32> to vector<24x1xf32>
    %cst_133 = arith.constant 3.200000e+01 : f32
    %240 = vector.broadcast %cst_133 : f32 to vector<24x1xf32>
    %241 = arith.divf %239, %240 : vector<24x1xf32>
    %242 = vector.broadcast %241 : vector<24x1xf32> to vector<24x32xf32>
    %243 = arith.subf %173, %242 : vector<24x32xf32>
    %244 = arith.mulf %243, %243 : vector<24x32xf32>
    %cst_134 = arith.constant dense<0.000000e+00> : vector<24xf32>
    %245 = vector.multi_reduction <add>, %244, %cst_134 [1] : vector<24x32xf32> to vector<24xf32>
    %246 = vector.shape_cast %245 : vector<24xf32> to vector<24x1xf32>
    %cst_135 = arith.constant 3.200000e+01 : f32
    %247 = vector.broadcast %cst_135 : f32 to vector<24x1xf32>
    %248 = arith.divf %246, %247 : vector<24x1xf32>
    %cst_136 = arith.constant 9.99999974E-6 : f32
    %249 = vector.broadcast %cst_136 : f32 to vector<24x1xf32>
    %250 = arith.addf %248, %249 : vector<24x1xf32>
    %251 = math.rsqrt %250 : vector<24x1xf32>
    %252 = vector.broadcast %251 : vector<24x1xf32> to vector<24x32xf32>
    %253 = arith.mulf %243, %252 : vector<24x32xf32>
    %c3_137 = arith.constant 3 : index
    %c0_138 = arith.constant 0 : index
    %c0_139 = arith.constant 0 : index
    %254 = vector.load %arg9[%c3_137, %c0_138, %c0_139] : memref<4x1x32xf32, #tpu.memory_space<vmem>>, vector<1x1x32xf32>
    %255 = vector.shape_cast %254 : vector<1x1x32xf32> to vector<1x32xf32>
    %256 = vector.broadcast %255 : vector<1x32xf32> to vector<24x32xf32>
    %257 = arith.mulf %253, %256 : vector<24x32xf32>
    %c3_140 = arith.constant 3 : index
    %c0_141 = arith.constant 0 : index
    %c0_142 = arith.constant 0 : index
    %258 = vector.load %arg10[%c3_140, %c0_141, %c0_142] : memref<4x1x32xf32, #tpu.memory_space<vmem>>, vector<1x1x32xf32>
    %259 = vector.shape_cast %258 : vector<1x1x32xf32> to vector<1x32xf32>
    %260 = vector.broadcast %259 : vector<1x32xf32> to vector<24x32xf32>
    %261 = arith.addf %257, %260 : vector<24x32xf32>
    %cst_143 = arith.constant 0.000000e+00 : f32
    %262 = vector.broadcast %cst_143 : f32 to vector<24x32xf32>
    %263 = arith.maximumf %261, %262 : vector<24x32xf32>
    %c0_144 = arith.constant 0 : index
    %c0_145 = arith.constant 0 : index
    %264 = vector.load %arg11[%c0_144, %c0_145] : memref<16x32xf32, #tpu.memory_space<vmem>>, vector<16x32xf32>
    tpu.vector_store %arg11[%c0_144, %c0_145], %237 {strides = array<i32>} : memref<16x32xf32, #tpu.memory_space<vmem>>, vector<16x32xf32>,
    %c0_146 = arith.constant 0 : index
    %c0_147 = arith.constant 0 : index
    %265 = vector.load %arg12[%c0_146, %c0_147] : memref<24x32xf32, #tpu.memory_space<vmem>>, vector<24x32xf32>
    tpu.vector_store %arg12[%c0_146, %c0_147], %263 {strides = array<i32>} : memref<24x32xf32, #tpu.memory_space<vmem>>, vector<24x32xf32>,
    return
  }
  func.func @transform_0(%arg0: i32) -> (i32, i32) {
    %c0_i32 = arith.constant 0 : i32
    %c0_i32_0 = arith.constant 0 : i32
    %c0_i32_1 = arith.constant 0 : i32
    return %c0_i32, %c0_i32_0 : i32, i32
  }
  func.func @transform_1(%arg0: i32) -> (i32, i32) {
    %c0_i32 = arith.constant 0 : i32
    %c0_i32_0 = arith.constant 0 : i32
    %c0_i32_1 = arith.constant 0 : i32
    return %c0_i32, %c0_i32_0 : i32, i32
  }
  func.func @transform_2(%arg0: i32) -> (i32, i32) {
    %c0_i32 = arith.constant 0 : i32
    %c0_i32_0 = arith.constant 0 : i32
    %c0_i32_1 = arith.constant 0 : i32
    return %c0_i32, %c0_i32_0 : i32, i32
  }
  func.func @transform_3(%arg0: i32) -> (i32, i32) {
    %c0_i32 = arith.constant 0 : i32
    %c0_i32_0 = arith.constant 0 : i32
    %c0_i32_1 = arith.constant 0 : i32
    return %c0_i32, %c0_i32_0 : i32, i32
  }
  func.func @transform_4(%arg0: i32) -> (i32, i32, i32) {
    %c0_i32 = arith.constant 0 : i32
    %c0_i32_0 = arith.constant 0 : i32
    %c0_i32_1 = arith.constant 0 : i32
    %c0_i32_2 = arith.constant 0 : i32
    return %c0_i32, %c0_i32_0, %c0_i32_1 : i32, i32, i32
  }
  func.func @transform_5(%arg0: i32) -> (i32, i32, i32) {
    %c0_i32 = arith.constant 0 : i32
    %c0_i32_0 = arith.constant 0 : i32
    %c0_i32_1 = arith.constant 0 : i32
    %c0_i32_2 = arith.constant 0 : i32
    return %c0_i32, %c0_i32_0, %c0_i32_1 : i32, i32, i32
  }
  func.func @transform_6(%arg0: i32) -> (i32, i32, i32) {
    %c0_i32 = arith.constant 0 : i32
    %c0_i32_0 = arith.constant 0 : i32
    %c0_i32_1 = arith.constant 0 : i32
    %c0_i32_2 = arith.constant 0 : i32
    return %c0_i32, %c0_i32_0, %c0_i32_1 : i32, i32, i32
  }
  func.func @transform_7(%arg0: i32) -> (i32, i32, i32) {
    %c0_i32 = arith.constant 0 : i32
    %c0_i32_0 = arith.constant 0 : i32
    %c0_i32_1 = arith.constant 0 : i32
    %c0_i32_2 = arith.constant 0 : i32
    return %c0_i32, %c0_i32_0, %c0_i32_1 : i32, i32, i32
  }
  func.func @transform_8(%arg0: i32) -> (i32, i32, i32) {
    %c0_i32 = arith.constant 0 : i32
    %c0_i32_0 = arith.constant 0 : i32
    %c0_i32_1 = arith.constant 0 : i32
    %c0_i32_2 = arith.constant 0 : i32
    return %c0_i32, %c0_i32_0, %c0_i32_1 : i32, i32, i32
  }
  func.func @transform_9(%arg0: i32) -> (i32, i32, i32) {
    %c0_i32 = arith.constant 0 : i32
    %c0_i32_0 = arith.constant 0 : i32
    %c0_i32_1 = arith.constant 0 : i32
    %c0_i32_2 = arith.constant 0 : i32
    return %c0_i32, %c0_i32_0, %c0_i32_1 : i32, i32, i32
  }
  func.func @transform_10(%arg0: i32) -> (i32, i32) {
    %c0_i32 = arith.constant 0 : i32
    %c0_i32_0 = arith.constant 0 : i32
    %c0_i32_1 = arith.constant 0 : i32
    return %c0_i32, %c0_i32_0 : i32, i32
  }
  func.func @transform_11(%arg0: i32) -> (i32, i32) {
    %c0_i32 = arith.constant 0 : i32
    %c0_i32_0 = arith.constant 0 : i32
    %c0_i32_1 = arith.constant 0 : i32
    return %c0_i32, %c0_i32_0 : i32, i32
  }
}

</mosaic_0001>

<llo_original>
// kernel: tpu_custom_call.1
$region0: #{tpu_custom_call.1}
  #allocation0 [shape = 'u32[]', space=smem, size = 0x4, offset = 0x4, fixed_abs, tag = 'smem constant byte address 0x4 - core index']
  #allocation1 [shape = 'u32[144,128]{1,0:T(1,128)}', space=vmem, size = 0x12000, scoped, tag = 'internal scratch']
  %s0 = inlined_call_operand.hbm [shape: f32[16,32], index: 0, kind: input, shape index: {}]
  %s1 = inlined_call_operand.hbm [shape: f32[24,32], index: 1, kind: input, shape index: {}]
  %s2 = inlined_call_operand.vmem [shape: s8[24,16], index: 2, kind: input, shape index: {}]
  %s3 = inlined_call_operand.vmem [shape: s8[16,24], index: 3, kind: input, shape index: {}]
  %s4 = inlined_call_operand.hbm [shape: f32[4,32,32], index: 4, kind: input, shape index: {}]
  %s5 = inlined_call_operand.vmem [shape: f32[4,1,32], index: 5, kind: input, shape index: {}]
  %s6 = inlined_call_operand.vmem [shape: f32[4,1,32], index: 6, kind: input, shape index: {}]
  %s7 = inlined_call_operand.vmem [shape: f32[4,1,32], index: 7, kind: input, shape index: {}]
  %s8 = inlined_call_operand.vmem [shape: f32[4,1,32], index: 8, kind: input, shape index: {}]
  %s9 = inlined_call_operand.vmem [shape: f32[4,1,32], index: 9, kind: input, shape index: {}]
  %s10 = inlined_call_operand.hbm [shape: f32[16,32], index: 10, kind: output, shape index: {0}]
  %s11 = inlined_call_operand.hbm [shape: f32[24,32], index: 11, kind: output, shape index: {1}]
  %12 = xla_tuple %s10, %s11
  %s13 = sld [smem:[#allocation0]]
  $region70: #{tpu_custom_call.1} parent=0
    _
  %s15 = ssub.s32 1, %s13
  %s16 = scalar_select 0, %s15, %s13
  $region1: #{tpu_custom_call.1} parent=0
    #allocation2 [shape = 'u8[8192]{0}', space=vmem, size = 0x2000, scoped, tag = 'input window, operand 0, single buffered']
    #allocation3 [shape = 's32[1]{0}', space=sflag, size = 0x4, scoped, tag = 'scoped memory for tpu_custom_call.1']
    #allocation4 [shape = 's32[1]{0}', space=sflag, size = 0x4, scoped, tag = 'scoped memory for tpu_custom_call.1']
    #allocation5 [shape = 'u8[12288]{0}', space=vmem, size = 0x3000, scoped, tag = 'input window, operand 1, single buffered']
    #allocation6 [shape = 's32[1]{0}', space=sflag, size = 0x4, scoped, tag = 'scoped memory for tpu_custom_call.1']
    #allocation7 [shape = 'u8[65536]{0}', space=vmem, size = 0x10000, scoped, tag = 'input window, operand 4, single buffered']
    #allocation8 [shape = 'u8[8192]{0}', space=vmem, size = 0x2000, scoped, tag = 'output window, operand 0, single buffered']
    #allocation9 [shape = 'u8[12288]{0}', space=vmem, size = 0x3000, scoped, tag = 'output window, operand 1, single buffered']
    #allocation10 [shape = 's32[1]{0}', space=sflag, size = 0x4, scoped, tag = 'scoped memory for tpu_custom_call.1']
    %17 = vsyncpa [#allocation3], 0
    %18 = vsyncpa [#allocation6], 0
    %19 = vsyncpa [#allocation4], 0
    %20 = vsyncpa [#allocation10], 0
    // Predicated region
    $region2: #{tpu_custom_call.1} parent=1 // pred_check
      _
    $region3: #{tpu_custom_call.1} parent=1 // pred_check_branch
      %22 = sbr.rel (0) target = $region5
    $region4: #{tpu_custom_call.1} parent=1 // pred_region
      %s24 = ssub.s32 256, 256
      %25 = vsyncadd [#allocation3], %s24
      %s26 = sshll.u32 [#allocation2], 4
      %s27 = int_to_ptr.vmem [resolvable:$true] %s26
      %32 = dma.hbm_to_vmem [thread:$0]  %s0, 256, %s27, [#allocation3], 128, 128, 8
    $region5: #{tpu_custom_call.1} parent=1 // pred_fallthru
      _
    // Predicated region
    $region6: #{tpu_custom_call.1} parent=1 // pred_check
      _
    $region7: #{tpu_custom_call.1} parent=1 // pred_check_branch
      %34 = sbr.rel (0) target = $region9
    $region8: #{tpu_custom_call.1} parent=1 // pred_region
      %s36 = ssub.s32 384, 384
      %37 = vsyncadd [#allocation6], %s36
      %s38 = sshll.u32 [#allocation5], 4
      %s39 = int_to_ptr.vmem [resolvable:$true] %s38
      %44 = dma.hbm_to_vmem [thread:$0]  %s1, 384, %s39, [#allocation6], 128, 128, 8
    $region9: #{tpu_custom_call.1} parent=1 // pred_fallthru
      _
    // Predicated region
    $region10: #{tpu_custom_call.1} parent=1 // pred_check
      _
    $region11: #{tpu_custom_call.1} parent=1 // pred_check_branch
      %46 = sbr.rel (0) target = $region13
    $region12: #{tpu_custom_call.1} parent=1 // pred_region
      _
    $region13: #{tpu_custom_call.1} parent=1 // pred_fallthru
      _
    // Predicated region
    $region14: #{tpu_custom_call.1} parent=1 // pred_check
      _
    $region15: #{tpu_custom_call.1} parent=1 // pred_check_branch
      %48 = sbr.rel (0) target = $region17
    $region16: #{tpu_custom_call.1} parent=1 // pred_region
      _
    $region17: #{tpu_custom_call.1} parent=1 // pred_fallthru
      _
    // Predicated region
    $region18: #{tpu_custom_call.1} parent=1 // pred_check
      _
    $region19: #{tpu_custom_call.1} parent=1 // pred_check_branch
      %50 = sbr.rel (0) target = $region21
    $region20: #{tpu_custom_call.1} parent=1 // pred_region
      %s52 = ssub.s32 2048, 2048
      %53 = vsyncadd [#allocation6], %s52
      %s54 = sshll.u32 [#allocation7], 4
      %s55 = int_to_ptr.vmem [resolvable:$true] %s54
      %60 = dma.hbm_to_vmem [thread:$0]  %s4, 2048, %s55, [#allocation6], 128, 128, 8
    $region21: #{tpu_custom_call.1} parent=1 // pred_fallthru
      _
    // Predicated region
    $region22: #{tpu_custom_call.1} parent=1 // pred_check
      _
    $region23: #{tpu_custom_call.1} parent=1 // pred_check_branch
      %62 = sbr.rel (0) target = $region25
    $region24: #{tpu_custom_call.1} parent=1 // pred_region
      _
    $region25: #{tpu_custom_call.1} parent=1 // pred_fallthru
      _
    // Predicated region
    $region26: #{tpu_custom_call.1} parent=1 // pred_check
      _
    $region27: #{tpu_custom_call.1} parent=1 // pred_check_branch
      %64 = sbr.rel (0) target = $region29
    $region28: #{tpu_custom_call.1} parent=1 // pred_region
      _
    $region29: #{tpu_custom_call.1} parent=1 // pred_fallthru
      _
    // Predicated region
    $region30: #{tpu_custom_call.1} parent=1 // pred_check
      _
    $region31: #{tpu_custom_call.1} parent=1 // pred_check_branch
      %66 = sbr.rel (0) target = $region33
    $region32: #{tpu_custom_call.1} parent=1 // pred_region
      _
    $region33: #{tpu_custom_call.1} parent=1 // pred_fallthru
      _
    // Predicated region
    $region34: #{tpu_custom_call.1} parent=1 // pred_check
      _
    $region35: #{tpu_custom_call.1} parent=1 // pred_check_branch
      %68 = sbr.rel (0) target = $region37
    $region36: #{tpu_custom_call.1} parent=1 // pred_region
      _
    $region37: #{tpu_custom_call.1} parent=1 // pred_fallthru
      _
    // Predicated region
    $region38: #{tpu_custom_call.1} parent=1 // pred_check
      _
    $region39: #{tpu_custom_call.1} parent=1 // pred_check_branch
      %70 = sbr.rel (0) target = $region41
    $region40: #{tpu_custom_call.1} parent=1 // pred_region
      _
    $region41: #{tpu_custom_call.1} parent=1 // pred_fallthru
      _
    // Predicated region
    $region42: #{tpu_custom_call.1} parent=1 // pred_check
      _
    $region43: #{tpu_custom_call.1} parent=1 // pred_check_branch
      %72 = sbr.rel (0) target = $region45
    $region44: #{tpu_custom_call.1} parent=1 // pred_region
      %73 = dma.done [#allocation3], 256
    $region45: #{tpu_custom_call.1} parent=1 // pred_fallthru
      _
    // Predicated region
    $region46: #{tpu_custom_call.1} parent=1 // pred_check
      _
    $region47: #{tpu_custom_call.1} parent=1 // pred_check_branch
      %75 = sbr.rel (0) target = $region49
    $region48: #{tpu_custom_call.1} parent=1 // pred_region
      %76 = dma.done [#allocation6], 384
    $region49: #{tpu_custom_call.1} parent=1 // pred_fallthru
      _
    // Predicated region
    $region50: #{tpu_custom_call.1} parent=1 // pred_check
      _
    $region51: #{tpu_custom_call.1} parent=1 // pred_check_branch
      %78 = sbr.rel (0) target = $region53
    $region52: #{tpu_custom_call.1} parent=1 // pred_region
      %79 = dma.done [#allocation6], 2048
    $region53: #{tpu_custom_call.1} parent=1 // pred_fallthru
      _
    %v82 = vld [vmem:[#allocation2] sm:$0xff]
    %v83 = vld [vmem:[#allocation2 + $0x8] sm:$0xff]
    %v84 = vld [vmem:[#allocation5] sm:$0xff]
    %v85 = vld [vmem:[#allocation5 + $0x8] sm:$0xff]
    %v86 = vld [vmem:[#allocation5 + $0x10] sm:$0xff]
    %v87 = vld [vmem:[%s2] sm:$0x3]
    %v88 = vld [vmem:[%s2 + $0x2] sm:$0x3]
    %v89 = vld [vmem:[%s2 + $0x4] sm:$0x3]
    %vm90 = vnez %v87
    %vm91 = vnez %v88
    %vm92 = vnez %v89
    %v93 = vld [vmem:[%s3] sm:$0x3]
    %v94 = vld [vmem:[%s3 + $0x2] sm:$0x3]
    %vm95 = vnez %v93
    %vm96 = vnez %v94
    %v97 = vld [vmem:[#allocation7] sm:$0xff]
    %v98 = vld [vmem:[#allocation7 + $0x8] sm:$0xff]
    %v99 = vld [vmem:[#allocation7 + $0x10] sm:$0xff]
    %v100 = vld [vmem:[#allocation7 + $0x18] sm:$0xff]
    %vm101 = vcmask 261120
    %v103 = vsel %vm101, %v82, 0
    %v106 = vsel %vm101, %v83, 0
    %108 = vmatprep.subr.mxu0 0.0
    %109 = vmatpush1.msra.mxu0 %v97
    %110 = vmatprep.subr.mxu0 0.0
    %111 = vmatpush1.msra.mxu0 %v98
    %112 = vmatprep.subr.mxu0 0.0
    %113 = vmatpush1.msra.mxu0 %v99
    %114 = vmatprep.subr.mxu0 0.0
    %115 = vmatpush1.msra.mxu0 %v100
    %116 = vmatprep.subr.mxu0 0.0
    %117 = vmatpush1.msra.mxu0 0.0
    %118 = vmatprep.subr.mxu0 0.0
    %119 = vmatpush1.msra.mxu0 0.0
    %120 = vmatprep.subr.mxu0 0.0
    %121 = vmatpush1.msra.mxu0 0.0
    %122 = vmatprep.subr.mxu0 0.0
    %123 = vmatpush1.msra.mxu0 0.0
    %124 = vmatprep.subr.mxu0 0.0
    %125 = vmatpush1.msra.mxu0 0.0
    %126 = vmatprep.subr.mxu0 0.0
    %127 = vmatpush1.msra.mxu0 0.0
    %128 = vmatprep.subr.mxu0 0.0
    %129 = vmatpush1.msra.mxu0 0.0
    %130 = vmatprep.subr.mxu0 0.0
    %131 = vmatpush1.msra.mxu0 0.0
    %132 = vmatprep.subr.mxu0 0.0
    %133 = vmatpush1.msra.mxu0 0.0
    %134 = vmatprep.subr.mxu0 0.0
    %135 = vmatpush1.msra.mxu0 0.0
    %136 = vmatprep.subr.mxu0 0.0
    %137 = vmatpush1.msra.mxu0 0.0
    %138 = vmatprep.subr.mxu0 0.0
    %139 = vmatpush1.msra.mxu0 0.0
    %140 = vmatprep.subr.mxu0 0.0
    %141 = vmatpush1.msra.mxu0 0.0
    %142 = vmatprep.subr.mxu0 0.0
    %143 = vmatpush1.msra.mxu0 0.0
    %144 = vmatprep.subr.mxu0 0.0
    %145 = vmatpush1.msra.mxu0 0.0
    %146 = vmatprep.subr.mxu0 0.0
    %147 = vmatpush1.msra.mxu0 0.0
    %148 = vmatprep.subr.mxu0 0.0
    %149 = vmatpush1.msra.mxu0 0.0
    %150 = vmatprep.subr.mxu0 0.0
    %151 = vmatpush1.msra.mxu0 0.0
    %152 = vmatprep.subr.mxu0 0.0
    %153 = vmatpush1.msra.mxu0 0.0
    %154 = vmatprep.subr.mxu0 0.0
    %155 = vmatpush1.msra.mxu0 0.0
    %156 = vmatprep.subr.mxu0 0.0
    %157 = vmatpush1.msra.mxu0 0.0
    %158 = vmatprep.subr.mxu0 0.0
    %159 = vmatpush1.msra.mxu0 0.0
    %160 = vmatprep.subr.mxu0 0.0
    %161 = vmatpush1.msra.mxu0 0.0
    %162 = vmatprep.subr.mxu0 0.0
    %163 = vmatpush1.msra.mxu0 0.0
    %164 = vmatprep.subr.mxu0 0.0
    %165 = vmatpush1.msra.mxu0 0.0
    %166 = vmatprep.subr.mxu0 0.0
    %167 = vmatpush1.msra.mxu0 0.0
    %168 = vmatprep.subr.mxu0 0.0
    %169 = vmatpush1.msra.mxu0 0.0
    %170 = vmatprep.subr.mxu0 0.0
    %171 = vmatpush1.msra.mxu0 0.0
    %172 = vmatprep.mubr.f32.mxu0 0.0
    %173 = vmatmul.mubr.f32.gmra.mrb[0].mxu0 %v103
    %v174 = vpop.f32.mrb[0].mxu0
    %v175 = vadd.f32 0.0, %v174
    %v176 = vpop.f32.mrb[0].mxu0
    %177 = vmatprep.mubr.f32.mxu0 0.0
    %178 = vmatmul.mubr.f32.gmra.mrb[0].mxu0 %v106
    %v179 = vpop.f32.mrb[0].mxu0
    %v180 = vadd.f32 0.0, %v179
    %v181 = vpop.f32.mrb[0].mxu0
    %182 = vdwg.mxu0
    %v183 = vld [vmem:[%s5] sm:$0x1]
    %v185 = vsel %vm101, %v183, 0
    %187 = vmatprep.subr.mxu0 0.0
    %188 = vmatpush1.xpose.msra.mxu0 %v103
    %189 = vmatprep.subr.mxu0 0.0
    %190 = vmatpush1.xpose.msra.mxu0 %v106
    %191 = vmatprep.subr.mxu0 0.0
    %192 = vmatpush1.xpose.msra.mxu0 0.0
    %193 = vmatprep.subr.mxu0 0.0
    %194 = vmatpush1.xpose.msra.mxu0 0.0
    %195 = vmatprep.subr.mxu0 0.0
    %196 = vmatpush1.xpose.msra.mxu0 0.0
    %197 = vmatprep.subr.mxu0 0.0
    %198 = vmatpush1.xpose.msra.mxu0 0.0
    %199 = vmatprep.subr.mxu0 0.0
    %200 = vmatpush1.xpose.msra.mxu0 0.0
    %201 = vmatprep.subr.mxu0 0.0
    %202 = vmatpush1.xpose.msra.mxu0 0.0
    %203 = vmatprep.subr.mxu0 0.0
    %204 = vmatpush1.xpose.msra.mxu0 0.0
    %205 = vmatprep.subr.mxu0 0.0
    %206 = vmatpush1.xpose.msra.mxu0 0.0
    %207 = vmatprep.subr.mxu0 0.0
    %208 = vmatpush1.xpose.msra.mxu0 0.0
    %209 = vmatprep.subr.mxu0 0.0
    %210 = vmatpush1.xpose.msra.mxu0 0.0
    %211 = vmatprep.subr.mxu0 0.0
    %212 = vmatpush1.xpose.msra.mxu0 0.0
    %213 = vmatprep.subr.mxu0 0.0
    %214 = vmatpush1.xpose.msra.mxu0 0.0
    %215 = vmatprep.subr.mxu0 0.0
    %216 = vmatpush1.xpose.msra.mxu0 0.0
    %217 = vmatprep.subr.mxu0 0.0
    %218 = vmatpush1.xpose.msra.mxu0 0.0
    %219 = vmatprep.subr.mxu0 0.0
    %220 = vmatpush1.xpose.msra.mxu0 0.0
    %221 = vmatprep.subr.mxu0 0.0
    %222 = vmatpush1.xpose.msra.mxu0 0.0
    %223 = vmatprep.subr.mxu0 0.0
    %224 = vmatpush1.xpose.msra.mxu0 0.0
    %225 = vmatprep.subr.mxu0 0.0
    %226 = vmatpush1.xpose.msra.mxu0 0.0
    %227 = vmatprep.subr.mxu0 0.0
    %228 = vmatpush1.xpose.msra.mxu0 0.0
    %229 = vmatprep.subr.mxu0 0.0
    %230 = vmatpush1.xpose.msra.mxu0 0.0
    %231 = vmatprep.subr.mxu0 0.0
    %232 = vmatpush1.xpose.msra.mxu0 0.0
    %233 = vmatprep.subr.mxu0 0.0
    %234 = vmatpush1.xpose.msra.mxu0 0.0
    %235 = vmatprep.subr.mxu0 0.0
    %236 = vmatpush1.xpose.msra.mxu0 0.0
    %237 = vmatprep.subr.mxu0 0.0
    %238 = vmatpush1.xpose.msra.mxu0 0.0
    %239 = vmatprep.subr.mxu0 0.0
    %240 = vmatpush1.xpose.msra.mxu0 0.0
    %241 = vmatprep.subr.mxu0 0.0
    %242 = vmatpush1.xpose.msra.mxu0 0.0
    %243 = vmatprep.subr.mxu0 0.0
    %244 = vmatpush1.xpose.msra.mxu0 0.0
    %245 = vmatprep.subr.mxu0 0.0
    %246 = vmatpush1.xpose.msra.mxu0 0.0
    %247 = vmatprep.subr.mxu0 0.0
    %248 = vmatpush1.xpose.msra.mxu0 0.0
    %249 = vmatprep.subr.mxu0 0.0
    %250 = vmatpush1.xpose.msra.mxu0 0.0
    %251 = vmatprep.mubr.f32.mxu0 0.0
    %252 = vmatmul.mubr.f32.gmra.mrb[0].mxu0 %v185
    %v253 = vpop.f32.mrb[0].mxu0
    %v254 = vadd.f32 0.0, %v253
    %v255 = vpop.f32.mrb[0].mxu0
    %256 = vdwg.mxu0
    %v257 = vld [vmem:[%s6] sm:$0x1]
    %v259 = vlaneseq
    %v260 = vshrl.u32 %v259, 7
    %v261 = vsub.s32 0, %v260
    %v262 = vrot.slane %v257, %v261
    %v264 = vmul.f32 %v84, %v262
    %v265 = vmul.f32 %v85, %v262
    %v266 = vmul.f32 %v86, %v262
    %v267 = vsel %vm101, %v264, 0.0
    %268 = vadd.xlane.f32.xlu0 %v267
    %v269 = vpop.xlane.xlu0 %268
    %v270 = vsel %vm101, %v265, 0.0
    %271 = vadd.xlane.f32.xlu0 %v270
    %v272 = vpop.xlane.xlu0 %271
    %v273 = vsel %vm101, %v266, 0.0
    %274 = vadd.xlane.f32.xlu0 %v273
    %v275 = vpop.xlane.xlu0 %274
    %v276 = vlaneseq
    %v277 = vshrl.u32 %v276, 7
    %v278 = vsub.s32 0, %v277
    %v279 = vrot.slane %v254, %v278
    %v280 = vadd.f32 %v269, %v279
    %v281 = vadd.f32 %v272, %v279
    %v282 = vadd.f32 %v275, %v279
    %vm283 = vcmp.gt.f32.partialorder %v280, 0.0
    %vm284 = vcmp.gt.f32.partialorder %v281, 0.0
    %vm285 = vcmp.gt.f32.partialorder %v282, 0.0
    %v286 = vmul.f32 %v280, 0.2
    %v287 = vmul.f32 %v281, 0.2
    %v288 = vmul.f32 %v282, 0.2
    %v289 = vsel %vm283, %v280, %v286
    %v290 = vsel %vm284, %v281, %v287
    %v291 = vsel %vm285, %v282, %v288
    %v292 = vsel %vm90, 16843009, 0
    %v293 = vsel %vm91, 16843009, 0
    %v294 = vsel %vm92, 16843009, 0
    %v295 = vunpack.c.0.s8 %v292
    %v296 = vunpack.c.0.s8 %v293
    %v297 = vunpack.c.0.s8 %v294
    %vm298 = vcmp.ne.s32.totalorder %v295, 0
    %vm299 = vcmp.ne.s32.totalorder %v296, 0
    %vm300 = vcmp.ne.s32.totalorder %v297, 0
    %v301 = vsel %vm298, %v289, -1e+30
    %v302 = vsel %vm299, %v290, -1e+30
    %v303 = vsel %vm300, %v291, -1e+30
    %vm304 = vcmask 130048
    %v305 = vsel %vm304, %v301, -inf
    %306 = vmax.xlane.f32.xlu0 %v305
    %v307 = vpop.xlane.xlu0 %306
    %v308 = vsel %vm304, %v302, -inf
    %309 = vmax.xlane.f32.xlu0 %v308
    %v310 = vpop.xlane.xlu0 %309
    %v311 = vsel %vm304, %v303, -inf
    %312 = vmax.xlane.f32.xlu0 %v311
    %v313 = vpop.xlane.xlu0 %312
    %v314 = vsub.f32 %v301, %v307
    %v315 = vsub.f32 %v302, %v310
    %v316 = vsub.f32 %v303, %v313
    %v317 = vmul.f32 %v314, 1.442695
    %v318 = vpow.pop %v317
    %v319 = vmul.f32 %v315, 1.442695
    %v320 = vpow.pop %v319
    %v321 = vmul.f32 %v316, 1.442695
    %v322 = vpow.pop %v321
    %v323 = vsel %vm298, %v318, 0.0
    %v324 = vsel %vm299, %v320, 0.0
    %v325 = vsel %vm300, %v322, 0.0
    %v326 = vsel %vm304, %v323, 0.0
    %327 = vadd.xlane.f32.xlu0 %v326
    %v328 = vpop.xlane.xlu0 %327
    %v329 = vsel %vm304, %v324, 0.0
    %330 = vadd.xlane.f32.xlu0 %v329
    %v331 = vpop.xlane.xlu0 %330
    %v332 = vsel %vm304, %v325, 0.0
    %333 = vadd.xlane.f32.xlu0 %v332
    %v334 = vpop.xlane.xlu0 %333
    %v335 = vmax.f32 %v328, 1e-16
    %v336 = vmax.f32 %v331, 1e-16
    %v337 = vmax.f32 %v334, 1e-16
    %v338 = vrcp.pop %v335
    %v339 = vrcp.pop %v336
    %v340 = vrcp.pop %v337
    %v341 = vmul.f32 %v323, %v338
    %v342 = vmul.f32 %v324, %v339
    %v343 = vmul.f32 %v325, %v340
    %v344 = vld [vmem:[%s7] sm:$0x1]
    %v346 = vlaneseq
    %v347 = vshrl.u32 %v346, 7
    %v348 = vsub.s32 0, %v347
    %v349 = vrot.slane %v344, %v348
    %v352 = vsel %vm304, %v341, 0
    %v355 = vsel %vm304, %v342, 0
    %v358 = vsel %vm304, %v343, 0
    %360 = vmatprep.subr.mxu0 0.0
    %361 = vmatpush1.msra.mxu0 %v175
    %362 = vmatprep.subr.mxu0 0.0
    %363 = vmatpush1.msra.mxu0 %v180
    %364 = vmatprep.subr.mxu0 0.0
    %365 = vmatpush1.msra.mxu0 0.0
    %366 = vmatprep.subr.mxu0 0.0
    %367 = vmatpush1.msra.mxu0 0.0
    %368 = vmatprep.subr.mxu0 0.0
    %369 = vmatpush1.msra.mxu0 0.0
    %370 = vmatprep.subr.mxu0 0.0
    %371 = vmatpush1.msra.mxu0 0.0
    %372 = vmatprep.subr.mxu0 0.0
    %373 = vmatpush1.msra.mxu0 0.0
    %374 = vmatprep.subr.mxu0 0.0
    %375 = vmatpush1.msra.mxu0 0.0
    %376 = vmatprep.subr.mxu0 0.0
    %377 = vmatpush1.msra.mxu0 0.0
    %378 = vmatprep.subr.mxu0 0.0
    %379 = vmatpush1.msra.mxu0 0.0
    %380 = vmatprep.subr.mxu0 0.0
    %381 = vmatpush1.msra.mxu0 0.0
    %382 = vmatprep.subr.mxu0 0.0
    %383 = vmatpush1.msra.mxu0 0.0
    %384 = vmatprep.subr.mxu0 0.0
    %385 = vmatpush1.msra.mxu0 0.0
    %386 = vmatprep.subr.mxu0 0.0
    %387 = vmatpush1.msra.mxu0 0.0
    %388 = vmatprep.subr.mxu0 0.0
    %389 = vmatpush1.msra.mxu0 0.0
    %390 = vmatprep.subr.mxu0 0.0
    %391 = vmatpush1.msra.mxu0 0.0
    %392 = vmatprep.subr.mxu0 0.0
    %393 = vmatpush1.msra.mxu0 0.0
    %394 = vmatprep.subr.mxu0 0.0
    %395 = vmatpush1.msra.mxu0 0.0
    %396 = vmatprep.subr.mxu0 0.0
    %397 = vmatpush1.msra.mxu0 0.0
    %398 = vmatprep.subr.mxu0 0.0
    %399 = vmatpush1.msra.mxu0 0.0
    %400 = vmatprep.subr.mxu0 0.0
    %401 = vmatpush1.msra.mxu0 0.0
    %402 = vmatprep.subr.mxu0 0.0
    %403 = vmatpush1.msra.mxu0 0.0
    %404 = vmatprep.subr.mxu0 0.0
    %405 = vmatpush1.msra.mxu0 0.0
    %406 = vmatprep.subr.mxu0 0.0
    %407 = vmatpush1.msra.mxu0 0.0
    %408 = vmatprep.subr.mxu0 0.0
    %409 = vmatpush1.msra.mxu0 0.0
    %410 = vmatprep.subr.mxu0 0.0
    %411 = vmatpush1.msra.mxu0 0.0
    %412 = vmatprep.subr.mxu0 0.0
    %413 = vmatpush1.msra.mxu0 0.0
    %414 = vmatprep.subr.mxu0 0.0
    %415 = vmatpush1.msra.mxu0 0.0
    %416 = vmatprep.subr.mxu0 0.0
    %417 = vmatpush1.msra.mxu0 0.0
    %418 = vmatprep.subr.mxu0 0.0
    %419 = vmatpush1.msra.mxu0 0.0
    %420 = vmatprep.subr.mxu0 0.0
    %421 = vmatpush1.msra.mxu0 0.0
    %422 = vmatprep.subr.mxu0 0.0
    %423 = vmatpush1.msra.mxu0 0.0
    %424 = vmatprep.mubr.f32.mxu0 0.0
    %425 = vmatmul.mubr.f32.gmra.mrb[0].mxu0 %v352
    %v426 = vpop.f32.mrb[0].mxu0
    %v427 = vadd.f32 %v349, %v426
    %v428 = vpop.f32.mrb[0].mxu0
    %429 = vmatprep.mubr.f32.mxu0 0.0
    %430 = vmatmul.mubr.f32.gmra.mrb[0].mxu0 %v355
    %v431 = vpop.f32.mrb[0].mxu0
    %v432 = vadd.f32 %v349, %v431
    %v433 = vpop.f32.mrb[0].mxu0
    %434 = vmatprep.mubr.f32.mxu0 0.0
    %435 = vmatmul.mubr.f32.gmra.mrb[0].mxu0 %v358
    %v436 = vpop.f32.mrb[0].mxu0
    %v437 = vadd.f32 %v349, %v436
    %v438 = vpop.f32.mrb[0].mxu0
    %439 = vdwg.mxu0
    %s440 = scalar_lea.vmem [#allocation7], 32
    %v441 = vld [vmem:[%s440] sm:$0xff]
    %v442 = vld [vmem:[%s440 + $0x8] sm:$0xff]
    %v443 = vld [vmem:[%s440 + $0x10] sm:$0xff]
    %v444 = vld [vmem:[%s440 + $0x18] sm:$0xff]
    %v446 = vsel %vm101, %v84, 0
    %v449 = vsel %vm101, %v85, 0
    %v452 = vsel %vm101, %v86, 0
    %454 = vmatprep.subr.mxu0 0.0
    %455 = vmatpush1.msra.mxu0 %v441
    %456 = vmatprep.subr.mxu0 0.0
    %457 = vmatpush1.msra.mxu0 %v442
    %458 = vmatprep.subr.mxu0 0.0
    %459 = vmatpush1.msra.mxu0 %v443
    %460 = vmatprep.subr.mxu0 0.0
    %461 = vmatpush1.msra.mxu0 %v444
    %462 = vmatprep.subr.mxu0 0.0
    %463 = vmatpush1.msra.mxu0 0.0
    %464 = vmatprep.subr.mxu0 0.0
    %465 = vmatpush1.msra.mxu0 0.0
    %466 = vmatprep.subr.mxu0 0.0
    %467 = vmatpush1.msra.mxu0 0.0
    %468 = vmatprep.subr.mxu0 0.0
    %469 = vmatpush1.msra.mxu0 0.0
    %470 = vmatprep.subr.mxu0 0.0
    %471 = vmatpush1.msra.mxu0 0.0
    %472 = vmatprep.subr.mxu0 0.0
    %473 = vmatpush1.msra.mxu0 0.0
    %474 = vmatprep.subr.mxu0 0.0
    %475 = vmatpush1.msra.mxu0 0.0
    %476 = vmatprep.subr.mxu0 0.0
    %477 = vmatpush1.msra.mxu0 0.0
    %478 = vmatprep.subr.mxu0 0.0
    %479 = vmatpush1.msra.mxu0 0.0
    %480 = vmatprep.subr.mxu0 0.0
    %481 = vmatpush1.msra.mxu0 0.0
    %482 = vmatprep.subr.mxu0 0.0
    %483 = vmatpush1.msra.mxu0 0.0
    %484 = vmatprep.subr.mxu0 0.0
    %485 = vmatpush1.msra.mxu0 0.0
    %486 = vmatprep.subr.mxu0 0.0
    %487 = vmatpush1.msra.mxu0 0.0
    %488 = vmatprep.subr.mxu0 0.0
    %489 = vmatpush1.msra.mxu0 0.0
    %490 = vmatprep.subr.mxu0 0.0
    %491 = vmatpush1.msra.mxu0 0.0
    %492 = vmatprep.subr.mxu0 0.0
    %493 = vmatpush1.msra.mxu0 0.0
    %494 = vmatprep.subr.mxu0 0.0
    %495 = vmatpush1.msra.mxu0 0.0
    %496 = vmatprep.subr.mxu0 0.0
    %497 = vmatpush1.msra.mxu0 0.0
    %498 = vmatprep.subr.mxu0 0.0
    %499 = vmatpush1.msra.mxu0 0.0
    %500 = vmatprep.subr.mxu0 0.0
    %501 = vmatpush1.msra.mxu0 0.0
    %502 = vmatprep.subr.mxu0 0.0
    %503 = vmatpush1.msra.mxu0 0.0
    %504 = vmatprep.subr.mxu0 0.0
    %505 = vmatpush1.msra.mxu0 0.0
    %506 = vmatprep.subr.mxu0 0.0
    %507 = vmatpush1.msra.mxu0 0.0
    %508 = vmatprep.subr.mxu0 0.0
    %509 = vmatpush1.msra.mxu0 0.0
    %510 = vmatprep.subr.mxu0 0.0
    %511 = vmatpush1.msra.mxu0 0.0
    %512 = vmatprep.subr.mxu0 0.0
    %513 = vmatpush1.msra.mxu0 0.0
    %514 = vmatprep.subr.mxu0 0.0
    %515 = vmatpush1.msra.mxu0 0.0
    %516 = vmatprep.subr.mxu0 0.0
    %517 = vmatpush1.msra.mxu0 0.0
    %518 = vmatprep.mubr.f32.mxu0 0.0
    %519 = vmatmul.mubr.f32.gmra.mrb[0].mxu0 %v446
    %v520 = vpop.f32.mrb[0].mxu0
    %v521 = vadd.f32 0.0, %v520
    %v522 = vpop.f32.mrb[0].mxu0
    %523 = vmatprep.mubr.f32.mxu0 0.0
    %524 = vmatmul.mubr.f32.gmra.mrb[0].mxu0 %v449
    %v525 = vpop.f32.mrb[0].mxu0
    %v526 = vadd.f32 0.0, %v525
    %v527 = vpop.f32.mrb[0].mxu0
    %528 = vmatprep.mubr.f32.mxu0 0.0
    %529 = vmatmul.mubr.f32.gmra.mrb[0].mxu0 %v452
    %v530 = vpop.f32.mrb[0].mxu0
    %v531 = vadd.f32 0.0, %v530
    %v532 = vpop.f32.mrb[0].mxu0
    %533 = vdwg.mxu0
    %s534 = scalar_lea.vmem %s5, 1
    %v535 = vld [vmem:[%s534] sm:$0x1]
    %v537 = vsel %vm101, %v535, 0
    %539 = vmatprep.subr.mxu0 0.0
    %540 = vmatpush1.xpose.msra.mxu0 %v446
    %541 = vmatprep.subr.mxu0 0.0
    %542 = vmatpush1.xpose.msra.mxu0 %v449
    %543 = vmatprep.subr.mxu0 0.0
    %544 = vmatpush1.xpose.msra.mxu0 %v452
    %545 = vmatprep.subr.mxu0 0.0
    %546 = vmatpush1.xpose.msra.mxu0 0.0
    %547 = vmatprep.subr.mxu0 0.0
    %548 = vmatpush1.xpose.msra.mxu0 0.0
    %549 = vmatprep.subr.mxu0 0.0
    %550 = vmatpush1.xpose.msra.mxu0 0.0
    %551 = vmatprep.subr.mxu0 0.0
    %552 = vmatpush1.xpose.msra.mxu0 0.0
    %553 = vmatprep.subr.mxu0 0.0
    %554 = vmatpush1.xpose.msra.mxu0 0.0
    %555 = vmatprep.subr.mxu0 0.0
    %556 = vmatpush1.xpose.msra.mxu0 0.0
    %557 = vmatprep.subr.mxu0 0.0
    %558 = vmatpush1.xpose.msra.mxu0 0.0
    %559 = vmatprep.subr.mxu0 0.0
    %560 = vmatpush1.xpose.msra.mxu0 0.0
    %561 = vmatprep.subr.mxu0 0.0
    %562 = vmatpush1.xpose.msra.mxu0 0.0
    %563 = vmatprep.subr.mxu0 0.0
    %564 = vmatpush1.xpose.msra.mxu0 0.0
    %565 = vmatprep.subr.mxu0 0.0
    %566 = vmatpush1.xpose.msra.mxu0 0.0
    %567 = vmatprep.subr.mxu0 0.0
    %568 = vmatpush1.xpose.msra.mxu0 0.0
    %569 = vmatprep.subr.mxu0 0.0
    %570 = vmatpush1.xpose.msra.mxu0 0.0
    %571 = vmatprep.subr.mxu0 0.0
    %572 = vmatpush1.xpose.msra.mxu0 0.0
    %573 = vmatprep.subr.mxu0 0.0
    %574 = vmatpush1.xpose.msra.mxu0 0.0
    %575 = vmatprep.subr.mxu0 0.0
    %576 = vmatpush1.xpose.msra.mxu0 0.0
    %577 = vmatprep.subr.mxu0 0.0
    %578 = vmatpush1.xpose.msra.mxu0 0.0
    %579 = vmatprep.subr.mxu0 0.0
    %580 = vmatpush1.xpose.msra.mxu0 0.0
    %581 = vmatprep.subr.mxu0 0.0
    %582 = vmatpush1.xpose.msra.mxu0 0.0
    %583 = vmatprep.subr.mxu0 0.0
    %584 = vmatpush1.xpose.msra.mxu0 0.0
    %585 = vmatprep.subr.mxu0 0.0
    %586 = vmatpush1.xpose.msra.mxu0 0.0
    %587 = vmatprep.subr.mxu0 0.0
    %588 = vmatpush1.xpose.msra.mxu0 0.0
    %589 = vmatprep.subr.mxu0 0.0
    %590 = vmatpush1.xpose.msra.mxu0 0.0
    %591 = vmatprep.subr.mxu0 0.0
    %592 = vmatpush1.xpose.msra.mxu0 0.0
    %593 = vmatprep.subr.mxu0 0.0
    %594 = vmatpush1.xpose.msra.mxu0 0.0
    %595 = vmatprep.subr.mxu0 0.0
    %596 = vmatpush1.xpose.msra.mxu0 0.0
    %597 = vmatprep.subr.mxu0 0.0
    %598 = vmatpush1.xpose.msra.mxu0 0.0
    %599 = vmatprep.subr.mxu0 0.0
    %600 = vmatpush1.xpose.msra.mxu0 0.0
    %601 = vmatprep.subr.mxu0 0.0
    %602 = vmatpush1.xpose.msra.mxu0 0.0
    %603 = vmatprep.mubr.f32.mxu0 0.0
    %604 = vmatmul.mubr.f32.gmra.mrb[0].mxu0 %v537
    %v605 = vpop.f32.mrb[0].mxu0
    %v606 = vadd.f32 0.0, %v605
    %v607 = vpop.f32.mrb[0].mxu0
    %608 = vdwg.mxu0
    %s609 = scalar_lea.vmem %s6, 1
    %v610 = vld [vmem:[%s609] sm:$0x1]
    %v612 = vlaneseq
    %v613 = vshrl.u32 %v612, 7
    %v614 = vsub.s32 0, %v613
    %v615 = vrot.slane %v610, %v614
    %v617 = vmul.f32 %v82, %v615
    %v618 = vmul.f32 %v83, %v615
    %v619 = vsel %vm101, %v617, 0.0
    %620 = vadd.xlane.f32.xlu0 %v619
    %v621 = vpop.xlane.xlu0 %620
    %v622 = vsel %vm101, %v618, 0.0
    %623 = vadd.xlane.f32.xlu0 %v622
    %v624 = vpop.xlane.xlu0 %623
    %v625 = vlaneseq
    %v626 = vshrl.u32 %v625, 7
    %v627 = vsub.s32 0, %v626
    %v628 = vrot.slane %v606, %v627
    %v629 = vadd.f32 %v621, %v628
    %v630 = vadd.f32 %v624, %v628
    %vm631 = vcmp.gt.f32.partialorder %v629, 0.0
    %vm632 = vcmp.gt.f32.partialorder %v630, 0.0
    %v633 = vmul.f32 %v629, 0.2
    %v634 = vmul.f32 %v630, 0.2
    %v635 = vsel %vm631, %v629, %v633
    %v636 = vsel %vm632, %v630, %v634
    %v637 = vsel %vm95, 16843009, 0
    %v638 = vsel %vm96, 16843009, 0
    %v639 = vunpack.c.0.s8 %v637
    %v640 = vunpack.c.0.s8 %v638
    %vm641 = vcmp.ne.s32.totalorder %v639, 0
    %vm642 = vcmp.ne.s32.totalorder %v640, 0
    %v643 = vsel %vm641, %v635, -1e+30
    %v644 = vsel %vm642, %v636, -1e+30
    %vm645 = vcmask 195584
    %v646 = vsel %vm645, %v643, -inf
    %647 = vmax.xlane.f32.xlu0 %v646
    %v648 = vpop.xlane.xlu0 %647
    %v649 = vsel %vm645, %v644, -inf
    %650 = vmax.xlane.f32.xlu0 %v649
    %v651 = vpop.xlane.xlu0 %650
    %v652 = vsub.f32 %v643, %v648
    %v653 = vsub.f32 %v644, %v651
    %v654 = vmul.f32 %v652, 1.442695
    %v655 = vpow.pop %v654
    %v656 = vmul.f32 %v653, 1.442695
    %v657 = vpow.pop %v656
    %v658 = vsel %vm641, %v655, 0.0
    %v659 = vsel %vm642, %v657, 0.0
    %v660 = vsel %vm645, %v658, 0.0
    %661 = vadd.xlane.f32.xlu0 %v660
    %v662 = vpop.xlane.xlu0 %661
    %v663 = vsel %vm645, %v659, 0.0
    %664 = vadd.xlane.f32.xlu0 %v663
    %v665 = vpop.xlane.xlu0 %664
    %v666 = vmax.f32 %v662, 1e-16
    %v667 = vmax.f32 %v665, 1e-16
    %v668 = vrcp.pop %v666
    %v669 = vrcp.pop %v667
    %v670 = vmul.f32 %v658, %v668
    %v671 = vmul.f32 %v659, %v669
    %s672 = scalar_lea.vmem %s7, 1
    %v673 = vld [vmem:[%s672] sm:$0x1]
    %v675 = vlaneseq
    %v676 = vshrl.u32 %v675, 7
    %v677 = vsub.s32 0, %v676
    %v678 = vrot.slane %v673, %v677
    %v681 = vsel %vm645, %v670, 0
    %v684 = vsel %vm645, %v671, 0
    %686 = vmatprep.subr.mxu0 0.0
    %687 = vmatpush1.msra.mxu0 %v521
    %688 = vmatprep.subr.mxu0 0.0
    %689 = vmatpush1.msra.mxu0 %v526
    %690 = vmatprep.subr.mxu0 0.0
    %691 = vmatpush1.msra.mxu0 %v531
    %692 = vmatprep.subr.mxu0 0.0
    %693 = vmatpush1.msra.mxu0 0.0
    %694 = vmatprep.subr.mxu0 0.0
    %695 = vmatpush1.msra.mxu0 0.0
    %696 = vmatprep.subr.mxu0 0.0
    %697 = vmatpush1.msra.mxu0 0.0
    %698 = vmatprep.subr.mxu0 0.0
    %699 = vmatpush1.msra.mxu0 0.0
    %700 = vmatprep.subr.mxu0 0.0
    %701 = vmatpush1.msra.mxu0 0.0
    %702 = vmatprep.subr.mxu0 0.0
    %703 = vmatpush1.msra.mxu0 0.0
    %704 = vmatprep.subr.mxu0 0.0
    %705 = vmatpush1.msra.mxu0 0.0
    %706 = vmatprep.subr.mxu0 0.0
    %707 = vmatpush1.msra.mxu0 0.0
    %708 = vmatprep.subr.mxu0 0.0
    %709 = vmatpush1.msra.mxu0 0.0
    %710 = vmatprep.subr.mxu0 0.0
    %711 = vmatpush1.msra.mxu0 0.0
    %712 = vmatprep.subr.mxu0 0.0
    %713 = vmatpush1.msra.mxu0 0.0
    %714 = vmatprep.subr.mxu0 0.0
    %715 = vmatpush1.msra.mxu0 0.0
    %716 = vmatprep.subr.mxu0 0.0
    %717 = vmatpush1.msra.mxu0 0.0
    %718 = vmatprep.subr.mxu0 0.0
    %719 = vmatpush1.msra.mxu0 0.0
    %720 = vmatprep.subr.mxu0 0.0
    %721 = vmatpush1.msra.mxu0 0.0
    %722 = vmatprep.subr.mxu0 0.0
    %723 = vmatpush1.msra.mxu0 0.0
    %724 = vmatprep.subr.mxu0 0.0
    %725 = vmatpush1.msra.mxu0 0.0
    %726 = vmatprep.subr.mxu0 0.0
    %727 = vmatpush1.msra.mxu0 0.0
    %728 = vmatprep.subr.mxu0 0.0
    %729 = vmatpush1.msra.mxu0 0.0
    %730 = vmatprep.subr.mxu0 0.0
    %731 = vmatpush1.msra.mxu0 0.0
    %732 = vmatprep.subr.mxu0 0.0
    %733 = vmatpush1.msra.mxu0 0.0
    %734 = vmatprep.subr.mxu0 0.0
    %735 = vmatpush1.msra.mxu0 0.0
    %736 = vmatprep.subr.mxu0 0.0
    %737 = vmatpush1.msra.mxu0 0.0
    %738 = vmatprep.subr.mxu0 0.0
    %739 = vmatpush1.msra.mxu0 0.0
    %740 = vmatprep.subr.mxu0 0.0
    %741 = vmatpush1.msra.mxu0 0.0
    %742 = vmatprep.subr.mxu0 0.0
    %743 = vmatpush1.msra.mxu0 0.0
    %744 = vmatprep.subr.mxu0 0.0
    %745 = vmatpush1.msra.mxu0 0.0
    %746 = vmatprep.subr.mxu0 0.0
    %747 = vmatpush1.msra.mxu0 0.0
    %748 = vmatprep.subr.mxu0 0.0
    %749 = vmatpush1.msra.mxu0 0.0
    %750 = vmatprep.mubr.f32.mxu0 0.0
    %751 = vmatmul.mubr.f32.gmra.mrb[0].mxu0 %v681
    %v752 = vpop.f32.mrb[0].mxu0
    %v753 = vadd.f32 %v678, %v752
    %v754 = vpop.f32.mrb[0].mxu0
    %755 = vmatprep.mubr.f32.mxu0 0.0
    %756 = vmatmul.mubr.f32.gmra.mrb[0].mxu0 %v684
    %v757 = vpop.f32.mrb[0].mxu0
    %v758 = vadd.f32 %v678, %v757
    %v759 = vpop.f32.mrb[0].mxu0
    %760 = vdwg.mxu0
    %v761 = vsel %vm101, %v753, 0.0
    %762 = vadd.xlane.f32.xlu0 %v761
    %v763 = vpop.xlane.xlu0 %762
    %v764 = vsel %vm101, %v758, 0.0
    %765 = vadd.xlane.f32.xlu0 %v764
    %v766 = vpop.xlane.xlu0 %765
    %v767 = vrcp.pop 32.0
    %v768 = vmul.f32 %v763, %v767
    %v769 = vmul.f32 %v766, %v767
    %v770 = vsub.f32 %v753, %v768
    %v771 = vsub.f32 %v758, %v769
    %v772 = vmul.f32 %v770, %v770
    %v773 = vmul.f32 %v771, %v771
    %v774 = vsel %vm101, %v772, 0.0
    %775 = vadd.xlane.f32.xlu0 %v774
    %v776 = vpop.xlane.xlu0 %775
    %v777 = vsel %vm101, %v773, 0.0
    %778 = vadd.xlane.f32.xlu0 %v777
    %v779 = vpop.xlane.xlu0 %778
    %v780 = vmul.f32 %v776, %v767
    %v781 = vmul.f32 %v779, %v767
    %v782 = vadd.f32 %v780, 1e-05
    %v783 = vadd.f32 %v781, 1e-05
    %v784 = vrsqrt.pop %v782
    %v785 = vrsqrt.pop %v783
    %v786 = vmul.f32 %v770, %v784
    %v787 = vmul.f32 %v771, %v785
    %v788 = vld [vmem:[%s8] sm:$0x1]
    %v790 = vlaneseq
    %v791 = vshrl.u32 %v790, 7
    %v792 = vsub.s32 0, %v791
    %v793 = vrot.slane %v788, %v792
    %v795 = vmul.f32 %v786, %v793
    %v796 = vmul.f32 %v787, %v793
    %v797 = vld [vmem:[%s9] sm:$0x1]
    %v799 = vlaneseq
    %v800 = vshrl.u32 %v799, 7
    %v801 = vsub.s32 0, %v800
    %v802 = vrot.slane %v797, %v801
    %v804 = vadd.f32 %v795, %v802
    %v805 = vadd.f32 %v796, %v802
    %v806 = vmax.f32 %v804, 0.0
    %v807 = vmax.f32 %v805, 0.0
    %v808 = vsel %vm101, %v427, 0.0
    %809 = vadd.xlane.f32.xlu0 %v808
    %v810 = vpop.xlane.xlu0 %809
    %v811 = vsel %vm101, %v432, 0.0
    %812 = vadd.xlane.f32.xlu0 %v811
    %v813 = vpop.xlane.xlu0 %812
    %v814 = vsel %vm101, %v437, 0.0
    %815 = vadd.xlane.f32.xlu0 %v814
    %v816 = vpop.xlane.xlu0 %815
    %v817 = vmul.f32 %v810, %v767
    %v818 = vmul.f32 %v813, %v767
    %v819 = vmul.f32 %v816, %v767
    %v820 = vsub.f32 %v427, %v817
    %v821 = vsub.f32 %v432, %v818
    %v822 = vsub.f32 %v437, %v819
    %v823 = vmul.f32 %v820, %v820
    %v824 = vmul.f32 %v821, %v821
    %v825 = vmul.f32 %v822, %v822
    %v826 = vsel %vm101, %v823, 0.0
    %827 = vadd.xlane.f32.xlu0 %v826
    %v828 = vpop.xlane.xlu0 %827
    %v829 = vsel %vm101, %v824, 0.0
    %830 = vadd.xlane.f32.xlu0 %v829
    %v831 = vpop.xlane.xlu0 %830
    %v832 = vsel %vm101, %v825, 0.0
    %833 = vadd.xlane.f32.xlu0 %v832
    %v834 = vpop.xlane.xlu0 %833
    %v835 = vmul.f32 %v828, %v767
    %v836 = vmul.f32 %v831, %v767
    %v837 = vmul.f32 %v834, %v767
    %v838 = vadd.f32 %v835, 1e-05
    %v839 = vadd.f32 %v836, 1e-05
    %v840 = vadd.f32 %v837, 1e-05
    %v841 = vrsqrt.pop %v838
    %v842 = vrsqrt.pop %v839
    %v843 = vrsqrt.pop %v840
    %v844 = vmul.f32 %v820, %v841
    %v845 = vmul.f32 %v821, %v842
    %v846 = vmul.f32 %v822, %v843
    %s847 = scalar_lea.vmem %s8, 1
    %v848 = vld [vmem:[%s847] sm:$0x1]
    %v850 = vlaneseq
    %v851 = vshrl.u32 %v850, 7
    %v852 = vsub.s32 0, %v851
    %v853 = vrot.slane %v848, %v852
    %v855 = vmul.f32 %v844, %v853
    %v856 = vmul.f32 %v845, %v853
    %v857 = vmul.f32 %v846, %v853
    %s858 = scalar_lea.vmem %s9, 1
    %v859 = vld [vmem:[%s858] sm:$0x1]
    %v861 = vlaneseq
    %v862 = vshrl.u32 %v861, 7
    %v863 = vsub.s32 0, %v862
    %v864 = vrot.slane %v859, %v863
    %v866 = vadd.f32 %v855, %v864
    %v867 = vadd.f32 %v856, %v864
    %v868 = vadd.f32 %v857, %v864
    %v869 = vmax.f32 %v866, 0.0
    %v870 = vmax.f32 %v867, 0.0
    %v871 = vmax.f32 %v868, 0.0
    %s872 = scalar_lea.vmem [#allocation7], 64
    %v873 = vld [vmem:[%s872] sm:$0xff]
    %v874 = vld [vmem:[%s872 + $0x8] sm:$0xff]
    %v875 = vld [vmem:[%s872 + $0x10] sm:$0xff]
    %v876 = vld [vmem:[%s872 + $0x18] sm:$0xff]
    %v878 = vsel %vm101, %v806, 0
    %v881 = vsel %vm101, %v807, 0
    %883 = vmatprep.subr.mxu0 0.0
    %884 = vmatpush1.msra.mxu0 %v873
    %885 = vmatprep.subr.mxu0 0.0
    %886 = vmatpush1.msra.mxu0 %v874
    %887 = vmatprep.subr.mxu0 0.0
    %888 = vmatpush1.msra.mxu0 %v875
    %889 = vmatprep.subr.mxu0 0.0
    %890 = vmatpush1.msra.mxu0 %v876
    %891 = vmatprep.subr.mxu0 0.0
    %892 = vmatpush1.msra.mxu0 0.0
    %893 = vmatprep.subr.mxu0 0.0
    %894 = vmatpush1.msra.mxu0 0.0
    %895 = vmatprep.subr.mxu0 0.0
    %896 = vmatpush1.msra.mxu0 0.0
    %897 = vmatprep.subr.mxu0 0.0
    %898 = vmatpush1.msra.mxu0 0.0
    %899 = vmatprep.subr.mxu0 0.0
    %900 = vmatpush1.msra.mxu0 0.0
    %901 = vmatprep.subr.mxu0 0.0
    %902 = vmatpush1.msra.mxu0 0.0
    %903 = vmatprep.subr.mxu0 0.0
    %904 = vmatpush1.msra.mxu0 0.0
    %905 = vmatprep.subr.mxu0 0.0
    %906 = vmatpush1.msra.mxu0 0.0
    %907 = vmatprep.subr.mxu0 0.0
    %908 = vmatpush1.msra.mxu0 0.0
    %909 = vmatprep.subr.mxu0 0.0
    %910 = vmatpush1.msra.mxu0 0.0
    %911 = vmatprep.subr.mxu0 0.0
    %912 = vmatpush1.msra.mxu0 0.0
    %913 = vmatprep.subr.mxu0 0.0
    %914 = vmatpush1.msra.mxu0 0.0
    %915 = vmatprep.subr.mxu0 0.0
    %916 = vmatpush1.msra.mxu0 0.0
    %917 = vmatprep.subr.mxu0 0.0
    %918 = vmatpush1.msra.mxu0 0.0
    %919 = vmatprep.subr.mxu0 0.0
    %920 = vmatpush1.msra.mxu0 0.0
    %921 = vmatprep.subr.mxu0 0.0
    %922 = vmatpush1.msra.mxu0 0.0
    %923 = vmatprep.subr.mxu0 0.0
    %924 = vmatpush1.msra.mxu0 0.0
    %925 = vmatprep.subr.mxu0 0.0
    %926 = vmatpush1.msra.mxu0 0.0
    %927 = vmatprep.subr.mxu0 0.0
    %928 = vmatpush1.msra.mxu0 0.0
    %929 = vmatprep.subr.mxu0 0.0
    %930 = vmatpush1.msra.mxu0 0.0
    %931 = vmatprep.subr.mxu0 0.0
    %932 = vmatpush1.msra.mxu0 0.0
    %933 = vmatprep.subr.mxu0 0.0
    %934 = vmatpush1.msra.mxu0 0.0
    %935 = vmatprep.subr.mxu0 0.0
    %936 = vmatpush1.msra.mxu0 0.0
    %937 = vmatprep.subr.mxu0 0.0
    %938 = vmatpush1.msra.mxu0 0.0
    %939 = vmatprep.subr.mxu0 0.0
    %940 = vmatpush1.msra.mxu0 0.0
    %941 = vmatprep.subr.mxu0 0.0
    %942 = vmatpush1.msra.mxu0 0.0
    %943 = vmatprep.subr.mxu0 0.0
    %944 = vmatpush1.msra.mxu0 0.0
    %945 = vmatprep.subr.mxu0 0.0
    %946 = vmatpush1.msra.mxu0 0.0
    %947 = vmatprep.mubr.f32.mxu0 0.0
    %948 = vmatmul.mubr.f32.gmra.mrb[0].mxu0 %v878
    %v949 = vpop.f32.mrb[0].mxu0
    %v950 = vadd.f32 0.0, %v949
    %v951 = vpop.f32.mrb[0].mxu0
    %952 = vmatprep.mubr.f32.mxu0 0.0
    %953 = vmatmul.mubr.f32.gmra.mrb[0].mxu0 %v881
    %v954 = vpop.f32.mrb[0].mxu0
    %v955 = vadd.f32 0.0, %v954
    %v956 = vpop.f32.mrb[0].mxu0
    %957 = vdwg.mxu0
    %s958 = scalar_lea.vmem %s5, 2
    %v959 = vld [vmem:[%s958] sm:$0x1]
    %v961 = vsel %vm101, %v959, 0
    %963 = vmatprep.subr.mxu0 0.0
    %964 = vmatpush1.xpose.msra.mxu0 %v878
    %965 = vmatprep.subr.mxu0 0.0
    %966 = vmatpush1.xpose.msra.mxu0 %v881
    %967 = vmatprep.subr.mxu0 0.0
    %968 = vmatpush1.xpose.msra.mxu0 0.0
    %969 = vmatprep.subr.mxu0 0.0
    %970 = vmatpush1.xpose.msra.mxu0 0.0
    %971 = vmatprep.subr.mxu0 0.0
    %972 = vmatpush1.xpose.msra.mxu0 0.0
    %973 = vmatprep.subr.mxu0 0.0
    %974 = vmatpush1.xpose.msra.mxu0 0.0
    %975 = vmatprep.subr.mxu0 0.0
    %976 = vmatpush1.xpose.msra.mxu0 0.0
    %977 = vmatprep.subr.mxu0 0.0
    %978 = vmatpush1.xpose.msra.mxu0 0.0
    %979 = vmatprep.subr.mxu0 0.0
    %980 = vmatpush1.xpose.msra.mxu0 0.0
    %981 = vmatprep.subr.mxu0 0.0
    %982 = vmatpush1.xpose.msra.mxu0 0.0
    %983 = vmatprep.subr.mxu0 0.0
    %984 = vmatpush1.xpose.msra.mxu0 0.0
    %985 = vmatprep.subr.mxu0 0.0
    %986 = vmatpush1.xpose.msra.mxu0 0.0
    %987 = vmatprep.subr.mxu0 0.0
    %988 = vmatpush1.xpose.msra.mxu0 0.0
    %989 = vmatprep.subr.mxu0 0.0
    %990 = vmatpush1.xpose.msra.mxu0 0.0
    %991 = vmatprep.subr.mxu0 0.0
    %992 = vmatpush1.xpose.msra.mxu0 0.0
    %993 = vmatprep.subr.mxu0 0.0
    %994 = vmatpush1.xpose.msra.mxu0 0.0
    %995 = vmatprep.subr.mxu0 0.0
    %996 = vmatpush1.xpose.msra.mxu0 0.0
    %997 = vmatprep.subr.mxu0 0.0
    %998 = vmatpush1.xpose.msra.mxu0 0.0
    %999 = vmatprep.subr.mxu0 0.0
    %1000 = vmatpush1.xpose.msra.mxu0 0.0
    %1001 = vmatprep.subr.mxu0 0.0
    %1002 = vmatpush1.xpose.msra.mxu0 0.0
    %1003 = vmatprep.subr.mxu0 0.0
    %1004 = vmatpush1.xpose.msra.mxu0 0.0
    %1005 = vmatprep.subr.mxu0 0.0
    %1006 = vmatpush1.xpose.msra.mxu0 0.0
    %1007 = vmatprep.subr.mxu0 0.0
    %1008 = vmatpush1.xpose.msra.mxu0 0.0
    %1009 = vmatprep.subr.mxu0 0.0
    %1010 = vmatpush1.xpose.msra.mxu0 0.0
    %1011 = vmatprep.subr.mxu0 0.0
    %1012 = vmatpush1.xpose.msra.mxu0 0.0
    %1013 = vmatprep.subr.mxu0 0.0
    %1014 = vmatpush1.xpose.msra.mxu0 0.0
    %1015 = vmatprep.subr.mxu0 0.0
    %1016 = vmatpush1.xpose.msra.mxu0 0.0
    %1017 = vmatprep.subr.mxu0 0.0
    %1018 = vmatpush1.xpose.msra.mxu0 0.0
    %1019 = vmatprep.subr.mxu0 0.0
    %1020 = vmatpush1.xpose.msra.mxu0 0.0
    %1021 = vmatprep.subr.mxu0 0.0
    %1022 = vmatpush1.xpose.msra.mxu0 0.0
    %1023 = vmatprep.subr.mxu0 0.0
    %1024 = vmatpush1.xpose.msra.mxu0 0.0
    %1025 = vmatprep.subr.mxu0 0.0
    %1026 = vmatpush1.xpose.msra.mxu0 0.0
    %1027 = vmatprep.mubr.f32.mxu0 0.0
    %1028 = vmatmul.mubr.f32.gmra.mrb[0].mxu0 %v961
    %v1029 = vpop.f32.mrb[0].mxu0
    %v1030 = vadd.f32 0.0, %v1029
    %v1031 = vpop.f32.mrb[0].mxu0
    %1032 = vdwg.mxu0
    %s1033 = scalar_lea.vmem %s6, 2
    %v1034 = vld [vmem:[%s1033] sm:$0x1]
    %v1036 = vlaneseq
    %v1037 = vshrl.u32 %v1036, 7
    %v1038 = vsub.s32 0, %v1037
    %v1039 = vrot.slane %v1034, %v1038
    %v1041 = vmul.f32 %v869, %v1039
    %v1042 = vmul.f32 %v870, %v1039
    %v1043 = vmul.f32 %v871, %v1039
    %v1044 = vsel %vm101, %v1041, 0.0
    %1045 = vadd.xlane.f32.xlu0 %v1044
    %v1046 = vpop.xlane.xlu0 %1045
    %v1047 = vsel %vm101, %v1042, 0.0
    %1048 = vadd.xlane.f32.xlu0 %v1047
    %v1049 = vpop.xlane.xlu0 %1048
    %v1050 = vsel %vm101, %v1043, 0.0
    %1051 = vadd.xlane.f32.xlu0 %v1050
    %v1052 = vpop.xlane.xlu0 %1051
    %v1053 = vlaneseq
    %v1054 = vshrl.u32 %v1053, 7
    %v1055 = vsub.s32 0, %v1054
    %v1056 = vrot.slane %v1030, %v1055
    %v1057 = vadd.f32 %v1046, %v1056
    %v1058 = vadd.f32 %v1049, %v1056
    %v1059 = vadd.f32 %v1052, %v1056
    %vm1060 = vcmp.gt.f32.partialorder %v1057, 0.0
    %vm1061 = vcmp.gt.f32.partialorder %v1058, 0.0
    %vm1062 = vcmp.gt.f32.partialorder %v1059, 0.0
    %v1063 = vmul.f32 %v1057, 0.2
    %v1064 = vmul.f32 %v1058, 0.2
    %v1065 = vmul.f32 %v1059, 0.2
    %v1066 = vsel %vm1060, %v1057, %v1063
    %v1067 = vsel %vm1061, %v1058, %v1064
    %v1068 = vsel %vm1062, %v1059, %v1065
    %v1069 = vsel %vm298, %v1066, -1e+30
    %v1070 = vsel %vm299, %v1067, -1e+30
    %v1071 = vsel %vm300, %v1068, -1e+30
    %v1072 = vsel %vm304, %v1069, -inf
    %1073 = vmax.xlane.f32.xlu0 %v1072
    %v1074 = vpop.xlane.xlu0 %1073
    %v1075 = vsel %vm304, %v1070, -inf
    %1076 = vmax.xlane.f32.xlu0 %v1075
    %v1077 = vpop.xlane.xlu0 %1076
    %v1078 = vsel %vm304, %v1071, -inf
    %1079 = vmax.xlane.f32.xlu0 %v1078
    %v1080 = vpop.xlane.xlu0 %1079
    %v1081 = vsub.f32 %v1069, %v1074
    %v1082 = vsub.f32 %v1070, %v1077
    %v1083 = vsub.f32 %v1071, %v1080
    %v1084 = vmul.f32 %v1081, 1.442695
    %v1085 = vpow.pop %v1084
    %v1086 = vmul.f32 %v1082, 1.442695
    %v1087 = vpow.pop %v1086
    %v1088 = vmul.f32 %v1083, 1.442695
    %v1089 = vpow.pop %v1088
    %v1090 = vsel %vm298, %v1085, 0.0
    %v1091 = vsel %vm299, %v1087, 0.0
    %v1092 = vsel %vm300, %v1089, 0.0
    %v1093 = vsel %vm304, %v1090, 0.0
    %1094 = vadd.xlane.f32.xlu0 %v1093
    %v1095 = vpop.xlane.xlu0 %1094
    %v1096 = vsel %vm304, %v1091, 0.0
    %1097 = vadd.xlane.f32.xlu0 %v1096
    %v1098 = vpop.xlane.xlu0 %1097
    %v1099 = vsel %vm304, %v1092, 0.0
    %1100 = vadd.xlane.f32.xlu0 %v1099
    %v1101 = vpop.xlane.xlu0 %1100
    %v1102 = vmax.f32 %v1095, 1e-16
    %v1103 = vmax.f32 %v1098, 1e-16
    %v1104 = vmax.f32 %v1101, 1e-16
    %v1105 = vrcp.pop %v1102
    %v1106 = vrcp.pop %v1103
    %v1107 = vrcp.pop %v1104
    %v1108 = vmul.f32 %v1090, %v1105
    %v1109 = vmul.f32 %v1091, %v1106
    %v1110 = vmul.f32 %v1092, %v1107
    %s1111 = scalar_lea.vmem %s7, 2
    %v1112 = vld [vmem:[%s1111] sm:$0x1]
    %v1114 = vlaneseq
    %v1115 = vshrl.u32 %v1114, 7
    %v1116 = vsub.s32 0, %v1115
    %v1117 = vrot.slane %v1112, %v1116
    %v1120 = vsel %vm304, %v1108, 0
    %v1123 = vsel %vm304, %v1109, 0
    %v1126 = vsel %vm304, %v1110, 0
    %1128 = vmatprep.subr.mxu0 0.0
    %1129 = vmatpush1.msra.mxu0 %v950
    %1130 = vmatprep.subr.mxu0 0.0
    %1131 = vmatpush1.msra.mxu0 %v955
    %1132 = vmatprep.subr.mxu0 0.0
    %1133 = vmatpush1.msra.mxu0 0.0
    %1134 = vmatprep.subr.mxu0 0.0
    %1135 = vmatpush1.msra.mxu0 0.0
    %1136 = vmatprep.subr.mxu0 0.0
    %1137 = vmatpush1.msra.mxu0 0.0
    %1138 = vmatprep.subr.mxu0 0.0
    %1139 = vmatpush1.msra.mxu0 0.0
    %1140 = vmatprep.subr.mxu0 0.0
    %1141 = vmatpush1.msra.mxu0 0.0
    %1142 = vmatprep.subr.mxu0 0.0
    %1143 = vmatpush1.msra.mxu0 0.0
    %1144 = vmatprep.subr.mxu0 0.0
    %1145 = vmatpush1.msra.mxu0 0.0
    %1146 = vmatprep.subr.mxu0 0.0
    %1147 = vmatpush1.msra.mxu0 0.0
    %1148 = vmatprep.subr.mxu0 0.0
    %1149 = vmatpush1.msra.mxu0 0.0
    %1150 = vmatprep.subr.mxu0 0.0
    %1151 = vmatpush1.msra.mxu0 0.0
    %1152 = vmatprep.subr.mxu0 0.0
    %1153 = vmatpush1.msra.mxu0 0.0
    %1154 = vmatprep.subr.mxu0 0.0
    %1155 = vmatpush1.msra.mxu0 0.0
    %1156 = vmatprep.subr.mxu0 0.0
    %1157 = vmatpush1.msra.mxu0 0.0
    %1158 = vmatprep.subr.mxu0 0.0
    %1159 = vmatpush1.msra.mxu0 0.0
    %1160 = vmatprep.subr.mxu0 0.0
    %1161 = vmatpush1.msra.mxu0 0.0
    %1162 = vmatprep.subr.mxu0 0.0
    %1163 = vmatpush1.msra.mxu0 0.0
    %1164 = vmatprep.subr.mxu0 0.0
    %1165 = vmatpush1.msra.mxu0 0.0
    %1166 = vmatprep.subr.mxu0 0.0
    %1167 = vmatpush1.msra.mxu0 0.0
    %1168 = vmatprep.subr.mxu0 0.0
    %1169 = vmatpush1.msra.mxu0 0.0
    %1170 = vmatprep.subr.mxu0 0.0
    %1171 = vmatpush1.msra.mxu0 0.0
    %1172 = vmatprep.subr.mxu0 0.0
    %1173 = vmatpush1.msra.mxu0 0.0
    %1174 = vmatprep.subr.mxu0 0.0
    %1175 = vmatpush1.msra.mxu0 0.0
    %1176 = vmatprep.subr.mxu0 0.0
    %1177 = vmatpush1.msra.mxu0 0.0
    %1178 = vmatprep.subr.mxu0 0.0
    %1179 = vmatpush1.msra.mxu0 0.0
    %1180 = vmatprep.subr.mxu0 0.0
    %1181 = vmatpush1.msra.mxu0 0.0
    %1182 = vmatprep.subr.mxu0 0.0
    %1183 = vmatpush1.msra.mxu0 0.0
    %1184 = vmatprep.subr.mxu0 0.0
    %1185 = vmatpush1.msra.mxu0 0.0
    %1186 = vmatprep.subr.mxu0 0.0
    %1187 = vmatpush1.msra.mxu0 0.0
    %1188 = vmatprep.subr.mxu0 0.0
    %1189 = vmatpush1.msra.mxu0 0.0
    %1190 = vmatprep.subr.mxu0 0.0
    %1191 = vmatpush1.msra.mxu0 0.0
    %1192 = vmatprep.mubr.f32.mxu0 0.0
    %1193 = vmatmul.mubr.f32.gmra.mrb[0].mxu0 %v1120
    %v1194 = vpop.f32.mrb[0].mxu0
    %v1195 = vadd.f32 %v1117, %v1194
    %v1196 = vpop.f32.mrb[0].mxu0
    %1197 = vmatprep.mubr.f32.mxu0 0.0
    %1198 = vmatmul.mubr.f32.gmra.mrb[0].mxu0 %v1123
    %v1199 = vpop.f32.mrb[0].mxu0
    %v1200 = vadd.f32 %v1117, %v1199
    %v1201 = vpop.f32.mrb[0].mxu0
    %1202 = vmatprep.mubr.f32.mxu0 0.0
    %1203 = vmatmul.mubr.f32.gmra.mrb[0].mxu0 %v1126
    %v1204 = vpop.f32.mrb[0].mxu0
    %v1205 = vadd.f32 %v1117, %v1204
    %v1206 = vpop.f32.mrb[0].mxu0
    %1207 = vdwg.mxu0
    %s1208 = scalar_lea.vmem [#allocation7], 96
    %v1209 = vld [vmem:[%s1208] sm:$0xff]
    %v1210 = vld [vmem:[%s1208 + $0x8] sm:$0xff]
    %v1211 = vld [vmem:[%s1208 + $0x10] sm:$0xff]
    %v1212 = vld [vmem:[%s1208 + $0x18] sm:$0xff]
    %v1214 = vsel %vm101, %v869, 0
    %v1217 = vsel %vm101, %v870, 0
    %v1220 = vsel %vm101, %v871, 0
    %1222 = vmatprep.subr.mxu0 0.0
    %1223 = vmatpush1.msra.mxu0 %v1209
    %1224 = vmatprep.subr.mxu0 0.0
    %1225 = vmatpush1.msra.mxu0 %v1210
    %1226 = vmatprep.subr.mxu0 0.0
    %1227 = vmatpush1.msra.mxu0 %v1211
    %1228 = vmatprep.subr.mxu0 0.0
    %1229 = vmatpush1.msra.mxu0 %v1212
    %1230 = vmatprep.subr.mxu0 0.0
    %1231 = vmatpush1.msra.mxu0 0.0
    %1232 = vmatprep.subr.mxu0 0.0
    %1233 = vmatpush1.msra.mxu0 0.0
    %1234 = vmatprep.subr.mxu0 0.0
    %1235 = vmatpush1.msra.mxu0 0.0
    %1236 = vmatprep.subr.mxu0 0.0
    %1237 = vmatpush1.msra.mxu0 0.0
    %1238 = vmatprep.subr.mxu0 0.0
    %1239 = vmatpush1.msra.mxu0 0.0
    %1240 = vmatprep.subr.mxu0 0.0
    %1241 = vmatpush1.msra.mxu0 0.0
    %1242 = vmatprep.subr.mxu0 0.0
    %1243 = vmatpush1.msra.mxu0 0.0
    %1244 = vmatprep.subr.mxu0 0.0
    %1245 = vmatpush1.msra.mxu0 0.0
    %1246 = vmatprep.subr.mxu0 0.0
    %1247 = vmatpush1.msra.mxu0 0.0
    %1248 = vmatprep.subr.mxu0 0.0
    %1249 = vmatpush1.msra.mxu0 0.0
    %1250 = vmatprep.subr.mxu0 0.0
    %1251 = vmatpush1.msra.mxu0 0.0
    %1252 = vmatprep.subr.mxu0 0.0
    %1253 = vmatpush1.msra.mxu0 0.0
    %1254 = vmatprep.subr.mxu0 0.0
    %1255 = vmatpush1.msra.mxu0 0.0
    %1256 = vmatprep.subr.mxu0 0.0
    %1257 = vmatpush1.msra.mxu0 0.0
    %1258 = vmatprep.subr.mxu0 0.0
    %1259 = vmatpush1.msra.mxu0 0.0
    %1260 = vmatprep.subr.mxu0 0.0
    %1261 = vmatpush1.msra.mxu0 0.0
    %1262 = vmatprep.subr.mxu0 0.0
    %1263 = vmatpush1.msra.mxu0 0.0
    %1264 = vmatprep.subr.mxu0 0.0
    %1265 = vmatpush1.msra.mxu0 0.0
    %1266 = vmatprep.subr.mxu0 0.0
    %1267 = vmatpush1.msra.mxu0 0.0
    %1268 = vmatprep.subr.mxu0 0.0
    %1269 = vmatpush1.msra.mxu0 0.0
    %1270 = vmatprep.subr.mxu0 0.0
    %1271 = vmatpush1.msra.mxu0 0.0
    %1272 = vmatprep.subr.mxu0 0.0
    %1273 = vmatpush1.msra.mxu0 0.0
    %1274 = vmatprep.subr.mxu0 0.0
    %1275 = vmatpush1.msra.mxu0 0.0
    %1276 = vmatprep.subr.mxu0 0.0
    %1277 = vmatpush1.msra.mxu0 0.0
    %1278 = vmatprep.subr.mxu0 0.0
    %1279 = vmatpush1.msra.mxu0 0.0
    %1280 = vmatprep.subr.mxu0 0.0
    %1281 = vmatpush1.msra.mxu0 0.0
    %1282 = vmatprep.subr.mxu0 0.0
    %1283 = vmatpush1.msra.mxu0 0.0
    %1284 = vmatprep.subr.mxu0 0.0
    %1285 = vmatpush1.msra.mxu0 0.0
    %1286 = vmatprep.mubr.f32.mxu0 0.0
    %1287 = vmatmul.mubr.f32.gmra.mrb[0].mxu0 %v1214
    %v1288 = vpop.f32.mrb[0].mxu0
    %v1289 = vadd.f32 0.0, %v1288
    %v1290 = vpop.f32.mrb[0].mxu0
    %1291 = vmatprep.mubr.f32.mxu0 0.0
    %1292 = vmatmul.mubr.f32.gmra.mrb[0].mxu0 %v1217
    %v1293 = vpop.f32.mrb[0].mxu0
    %v1294 = vadd.f32 0.0, %v1293
    %v1295 = vpop.f32.mrb[0].mxu0
    %1296 = vmatprep.mubr.f32.mxu0 0.0
    %1297 = vmatmul.mubr.f32.gmra.mrb[0].mxu0 %v1220
    %v1298 = vpop.f32.mrb[0].mxu0
    %v1299 = vadd.f32 0.0, %v1298
    %v1300 = vpop.f32.mrb[0].mxu0
    %1301 = vdwg.mxu0
    %s1302 = scalar_lea.vmem %s5, 3
    %v1303 = vld [vmem:[%s1302] sm:$0x1]
    %v1305 = vsel %vm101, %v1303, 0
    %1307 = vmatprep.subr.mxu0 0.0
    %1308 = vmatpush1.xpose.msra.mxu0 %v1214
    %1309 = vmatprep.subr.mxu0 0.0
    %1310 = vmatpush1.xpose.msra.mxu0 %v1217
    %1311 = vmatprep.subr.mxu0 0.0
    %1312 = vmatpush1.xpose.msra.mxu0 %v1220
    %1313 = vmatprep.subr.mxu0 0.0
    %1314 = vmatpush1.xpose.msra.mxu0 0.0
    %1315 = vmatprep.subr.mxu0 0.0
    %1316 = vmatpush1.xpose.msra.mxu0 0.0
    %1317 = vmatprep.subr.mxu0 0.0
    %1318 = vmatpush1.xpose.msra.mxu0 0.0
    %1319 = vmatprep.subr.mxu0 0.0
    %1320 = vmatpush1.xpose.msra.mxu0 0.0
    %1321 = vmatprep.subr.mxu0 0.0
    %1322 = vmatpush1.xpose.msra.mxu0 0.0
    %1323 = vmatprep.subr.mxu0 0.0
    %1324 = vmatpush1.xpose.msra.mxu0 0.0
    %1325 = vmatprep.subr.mxu0 0.0
    %1326 = vmatpush1.xpose.msra.mxu0 0.0
    %1327 = vmatprep.subr.mxu0 0.0
    %1328 = vmatpush1.xpose.msra.mxu0 0.0
    %1329 = vmatprep.subr.mxu0 0.0
    %1330 = vmatpush1.xpose.msra.mxu0 0.0
    %1331 = vmatprep.subr.mxu0 0.0
    %1332 = vmatpush1.xpose.msra.mxu0 0.0
    %1333 = vmatprep.subr.mxu0 0.0
    %1334 = vmatpush1.xpose.msra.mxu0 0.0
    %1335 = vmatprep.subr.mxu0 0.0
    %1336 = vmatpush1.xpose.msra.mxu0 0.0
    %1337 = vmatprep.subr.mxu0 0.0
    %1338 = vmatpush1.xpose.msra.mxu0 0.0
    %1339 = vmatprep.subr.mxu0 0.0
    %1340 = vmatpush1.xpose.msra.mxu0 0.0
    %1341 = vmatprep.subr.mxu0 0.0
    %1342 = vmatpush1.xpose.msra.mxu0 0.0
    %1343 = vmatprep.subr.mxu0 0.0
    %1344 = vmatpush1.xpose.msra.mxu0 0.0
    %1345 = vmatprep.subr.mxu0 0.0
    %1346 = vmatpush1.xpose.msra.mxu0 0.0
    %1347 = vmatprep.subr.mxu0 0.0
    %1348 = vmatpush1.xpose.msra.mxu0 0.0
    %1349 = vmatprep.subr.mxu0 0.0
    %1350 = vmatpush1.xpose.msra.mxu0 0.0
    %1351 = vmatprep.subr.mxu0 0.0
    %1352 = vmatpush1.xpose.msra.mxu0 0.0
    %1353 = vmatprep.subr.mxu0 0.0
    %1354 = vmatpush1.xpose.msra.mxu0 0.0
    %1355 = vmatprep.subr.mxu0 0.0
    %1356 = vmatpush1.xpose.msra.mxu0 0.0
    %1357 = vmatprep.subr.mxu0 0.0
    %1358 = vmatpush1.xpose.msra.mxu0 0.0
    %1359 = vmatprep.subr.mxu0 0.0
    %1360 = vmatpush1.xpose.msra.mxu0 0.0
    %1361 = vmatprep.subr.mxu0 0.0
    %1362 = vmatpush1.xpose.msra.mxu0 0.0
    %1363 = vmatprep.subr.mxu0 0.0
    %1364 = vmatpush1.xpose.msra.mxu0 0.0
    %1365 = vmatprep.subr.mxu0 0.0
    %1366 = vmatpush1.xpose.msra.mxu0 0.0
    %1367 = vmatprep.subr.mxu0 0.0
    %1368 = vmatpush1.xpose.msra.mxu0 0.0
    %1369 = vmatprep.subr.mxu0 0.0
    %1370 = vmatpush1.xpose.msra.mxu0 0.0
    %1371 = vmatprep.mubr.f32.mxu0 0.0
    %1372 = vmatmul.mubr.f32.gmra.mrb[0].mxu0 %v1305
    %v1373 = vpop.f32.mrb[0].mxu0
    %v1374 = vadd.f32 0.0, %v1373
    %v1375 = vpop.f32.mrb[0].mxu0
    %1376 = vdwg.mxu0
    %s1377 = scalar_lea.vmem %s6, 3
    %v1378 = vld [vmem:[%s1377] sm:$0x1]
    %v1380 = vlaneseq
    %v1381 = vshrl.u32 %v1380, 7
    %v1382 = vsub.s32 0, %v1381
    %v1383 = vrot.slane %v1378, %v1382
    %v1385 = vmul.f32 %v806, %v1383
    %v1386 = vmul.f32 %v807, %v1383
    %v1387 = vsel %vm101, %v1385, 0.0
    %1388 = vadd.xlane.f32.xlu0 %v1387
    %v1389 = vpop.xlane.xlu0 %1388
    %v1390 = vsel %vm101, %v1386, 0.0
    %1391 = vadd.xlane.f32.xlu0 %v1390
    %v1392 = vpop.xlane.xlu0 %1391
    %v1393 = vlaneseq
    %v1394 = vshrl.u32 %v1393, 7
    %v1395 = vsub.s32 0, %v1394
    %v1396 = vrot.slane %v1374, %v1395
    %v1397 = vadd.f32 %v1389, %v1396
    %v1398 = vadd.f32 %v1392, %v1396
    %vm1399 = vcmp.gt.f32.partialorder %v1397, 0.0
    %vm1400 = vcmp.gt.f32.partialorder %v1398, 0.0
    %v1401 = vmul.f32 %v1397, 0.2
    %v1402 = vmul.f32 %v1398, 0.2
    %v1403 = vsel %vm1399, %v1397, %v1401
    %v1404 = vsel %vm1400, %v1398, %v1402
    %v1405 = vsel %vm641, %v1403, -1e+30
    %v1406 = vsel %vm642, %v1404, -1e+30
    %v1407 = vsel %vm645, %v1405, -inf
    %1408 = vmax.xlane.f32.xlu0 %v1407
    %v1409 = vpop.xlane.xlu0 %1408
    %v1410 = vsel %vm645, %v1406, -inf
    %1411 = vmax.xlane.f32.xlu0 %v1410
    %v1412 = vpop.xlane.xlu0 %1411
    %v1413 = vsub.f32 %v1405, %v1409
    %v1414 = vsub.f32 %v1406, %v1412
    %v1415 = vmul.f32 %v1413, 1.442695
    %v1416 = vpow.pop %v1415
    %v1417 = vmul.f32 %v1414, 1.442695
    %v1418 = vpow.pop %v1417
    %v1419 = vsel %vm641, %v1416, 0.0
    %v1420 = vsel %vm642, %v1418, 0.0
    %v1421 = vsel %vm645, %v1419, 0.0
    %1422 = vadd.xlane.f32.xlu0 %v1421
    %v1423 = vpop.xlane.xlu0 %1422
    %v1424 = vsel %vm645, %v1420, 0.0
    %1425 = vadd.xlane.f32.xlu0 %v1424
    %v1426 = vpop.xlane.xlu0 %1425
    %v1427 = vmax.f32 %v1423, 1e-16
    %v1428 = vmax.f32 %v1426, 1e-16
    %v1429 = vrcp.pop %v1427
    %v1430 = vrcp.pop %v1428
    %v1431 = vmul.f32 %v1419, %v1429
    %v1432 = vmul.f32 %v1420, %v1430
    %s1433 = scalar_lea.vmem %s7, 3
    %v1434 = vld [vmem:[%s1433] sm:$0x1]
    %v1436 = vlaneseq
    %v1437 = vshrl.u32 %v1436, 7
    %v1438 = vsub.s32 0, %v1437
    %v1439 = vrot.slane %v1434, %v1438
    %v1442 = vsel %vm645, %v1431, 0
    %v1445 = vsel %vm645, %v1432, 0
    %1447 = vmatprep.subr.mxu0 0.0
    %1448 = vmatpush1.msra.mxu0 %v1289
    %1449 = vmatprep.subr.mxu0 0.0
    %1450 = vmatpush1.msra.mxu0 %v1294
    %1451 = vmatprep.subr.mxu0 0.0
    %1452 = vmatpush1.msra.mxu0 %v1299
    %1453 = vmatprep.subr.mxu0 0.0
    %1454 = vmatpush1.msra.mxu0 0.0
    %1455 = vmatprep.subr.mxu0 0.0
    %1456 = vmatpush1.msra.mxu0 0.0
    %1457 = vmatprep.subr.mxu0 0.0
    %1458 = vmatpush1.msra.mxu0 0.0
    %1459 = vmatprep.subr.mxu0 0.0
    %1460 = vmatpush1.msra.mxu0 0.0
    %1461 = vmatprep.subr.mxu0 0.0
    %1462 = vmatpush1.msra.mxu0 0.0
    %1463 = vmatprep.subr.mxu0 0.0
    %1464 = vmatpush1.msra.mxu0 0.0
    %1465 = vmatprep.subr.mxu0 0.0
    %1466 = vmatpush1.msra.mxu0 0.0
    %1467 = vmatprep.subr.mxu0 0.0
    %1468 = vmatpush1.msra.mxu0 0.0
    %1469 = vmatprep.subr.mxu0 0.0
    %1470 = vmatpush1.msra.mxu0 0.0
    %1471 = vmatprep.subr.mxu0 0.0
    %1472 = vmatpush1.msra.mxu0 0.0
    %1473 = vmatprep.subr.mxu0 0.0
    %1474 = vmatpush1.msra.mxu0 0.0
    %1475 = vmatprep.subr.mxu0 0.0
    %1476 = vmatpush1.msra.mxu0 0.0
    %1477 = vmatprep.subr.mxu0 0.0
    %1478 = vmatpush1.msra.mxu0 0.0
    %1479 = vmatprep.subr.mxu0 0.0
    %1480 = vmatpush1.msra.mxu0 0.0
    %1481 = vmatprep.subr.mxu0 0.0
    %1482 = vmatpush1.msra.mxu0 0.0
    %1483 = vmatprep.subr.mxu0 0.0
    %1484 = vmatpush1.msra.mxu0 0.0
    %1485 = vmatprep.subr.mxu0 0.0
    %1486 = vmatpush1.msra.mxu0 0.0
    %1487 = vmatprep.subr.mxu0 0.0
    %1488 = vmatpush1.msra.mxu0 0.0
    %1489 = vmatprep.subr.mxu0 0.0
    %1490 = vmatpush1.msra.mxu0 0.0
    %1491 = vmatprep.subr.mxu0 0.0
    %1492 = vmatpush1.msra.mxu0 0.0
    %1493 = vmatprep.subr.mxu0 0.0
    %1494 = vmatpush1.msra.mxu0 0.0
    %1495 = vmatprep.subr.mxu0 0.0
    %1496 = vmatpush1.msra.mxu0 0.0
    %1497 = vmatprep.subr.mxu0 0.0
    %1498 = vmatpush1.msra.mxu0 0.0
    %1499 = vmatprep.subr.mxu0 0.0
    %1500 = vmatpush1.msra.mxu0 0.0
    %1501 = vmatprep.subr.mxu0 0.0
    %1502 = vmatpush1.msra.mxu0 0.0
    %1503 = vmatprep.subr.mxu0 0.0
    %1504 = vmatpush1.msra.mxu0 0.0
    %1505 = vmatprep.subr.mxu0 0.0
    %1506 = vmatpush1.msra.mxu0 0.0
    %1507 = vmatprep.subr.mxu0 0.0
    %1508 = vmatpush1.msra.mxu0 0.0
    %1509 = vmatprep.subr.mxu0 0.0
    %1510 = vmatpush1.msra.mxu0 0.0
    %1511 = vmatprep.mubr.f32.mxu0 0.0
    %1512 = vmatmul.mubr.f32.gmra.mrb[0].mxu0 %v1442
    %v1513 = vpop.f32.mrb[0].mxu0
    %v1514 = vadd.f32 %v1439, %v1513
    %v1515 = vpop.f32.mrb[0].mxu0
    %1516 = vmatprep.mubr.f32.mxu0 0.0
    %1517 = vmatmul.mubr.f32.gmra.mrb[0].mxu0 %v1445
    %v1518 = vpop.f32.mrb[0].mxu0
    %v1519 = vadd.f32 %v1439, %v1518
    %v1520 = vpop.f32.mrb[0].mxu0
    %1521 = vdwg.mxu0
    %v1522 = vsel %vm101, %v1514, 0.0
    %1523 = vadd.xlane.f32.xlu0 %v1522
    %v1524 = vpop.xlane.xlu0 %1523
    %v1525 = vsel %vm101, %v1519, 0.0
    %1526 = vadd.xlane.f32.xlu0 %v1525
    %v1527 = vpop.xlane.xlu0 %1526
    %v1528 = vmul.f32 %v1524, %v767
    %v1529 = vmul.f32 %v1527, %v767
    %v1530 = vsub.f32 %v1514, %v1528
    %v1531 = vsub.f32 %v1519, %v1529
    %v1532 = vmul.f32 %v1530, %v1530
    %v1533 = vmul.f32 %v1531, %v1531
    %v1534 = vsel %vm101, %v1532, 0.0
    %1535 = vadd.xlane.f32.xlu0 %v1534
    %v1536 = vpop.xlane.xlu0 %1535
    %v1537 = vsel %vm101, %v1533, 0.0
    %1538 = vadd.xlane.f32.xlu0 %v1537
    %v1539 = vpop.xlane.xlu0 %1538
    %v1540 = vmul.f32 %v1536, %v767
    %v1541 = vmul.f32 %v1539, %v767
    %v1542 = vadd.f32 %v1540, 1e-05
    %v1543 = vadd.f32 %v1541, 1e-05
    %v1544 = vrsqrt.pop %v1542
    %v1545 = vrsqrt.pop %v1543
    %v1546 = vmul.f32 %v1530, %v1544
    %v1547 = vmul.f32 %v1531, %v1545
    %s1548 = scalar_lea.vmem %s8, 2
    %v1549 = vld [vmem:[%s1548] sm:$0x1]
    %v1551 = vlaneseq
    %v1552 = vshrl.u32 %v1551, 7
    %v1553 = vsub.s32 0, %v1552
    %v1554 = vrot.slane %v1549, %v1553
    %v1556 = vmul.f32 %v1546, %v1554
    %v1557 = vmul.f32 %v1547, %v1554
    %s1558 = scalar_lea.vmem %s9, 2
    %v1559 = vld [vmem:[%s1558] sm:$0x1]
    %v1561 = vlaneseq
    %v1562 = vshrl.u32 %v1561, 7
    %v1563 = vsub.s32 0, %v1562
    %v1564 = vrot.slane %v1559, %v1563
    %v1566 = vadd.f32 %v1556, %v1564
    %v1567 = vadd.f32 %v1557, %v1564
    %v1568 = vmax.f32 %v1566, 0.0
    %v1569 = vmax.f32 %v1567, 0.0
    %v1570 = vsel %vm101, %v1195, 0.0
    %1571 = vadd.xlane.f32.xlu0 %v1570
    %v1572 = vpop.xlane.xlu0 %1571
    %v1573 = vsel %vm101, %v1200, 0.0
    %1574 = vadd.xlane.f32.xlu0 %v1573
    %v1575 = vpop.xlane.xlu0 %1574
    %v1576 = vsel %vm101, %v1205, 0.0
    %1577 = vadd.xlane.f32.xlu0 %v1576
    %v1578 = vpop.xlane.xlu0 %1577
    %v1579 = vmul.f32 %v1572, %v767
    %v1580 = vmul.f32 %v1575, %v767
    %v1581 = vmul.f32 %v1578, %v767
    %v1582 = vsub.f32 %v1195, %v1579
    %v1583 = vsub.f32 %v1200, %v1580
    %v1584 = vsub.f32 %v1205, %v1581
    %v1585 = vmul.f32 %v1582, %v1582
    %v1586 = vmul.f32 %v1583, %v1583
    %v1587 = vmul.f32 %v1584, %v1584
    %v1588 = vsel %vm101, %v1585, 0.0
    %1589 = vadd.xlane.f32.xlu0 %v1588
    %v1590 = vpop.xlane.xlu0 %1589
    %v1591 = vsel %vm101, %v1586, 0.0
    %1592 = vadd.xlane.f32.xlu0 %v1591
    %v1593 = vpop.xlane.xlu0 %1592
    %v1594 = vsel %vm101, %v1587, 0.0
    %1595 = vadd.xlane.f32.xlu0 %v1594
    %v1596 = vpop.xlane.xlu0 %1595
    %v1597 = vmul.f32 %v1590, %v767
    %v1598 = vmul.f32 %v1593, %v767
    %v1599 = vmul.f32 %v1596, %v767
    %v1600 = vadd.f32 %v1597, 1e-05
    %v1601 = vadd.f32 %v1598, 1e-05
    %v1602 = vadd.f32 %v1599, 1e-05
    %v1603 = vrsqrt.pop %v1600
    %v1604 = vrsqrt.pop %v1601
    %v1605 = vrsqrt.pop %v1602
    %v1606 = vmul.f32 %v1582, %v1603
    %v1607 = vmul.f32 %v1583, %v1604
    %v1608 = vmul.f32 %v1584, %v1605
    %s1609 = scalar_lea.vmem %s8, 3
    %v1610 = vld [vmem:[%s1609] sm:$0x1]
    %v1612 = vlaneseq
    %v1613 = vshrl.u32 %v1612, 7
    %v1614 = vsub.s32 0, %v1613
    %v1615 = vrot.slane %v1610, %v1614
    %v1617 = vmul.f32 %v1606, %v1615
    %v1618 = vmul.f32 %v1607, %v1615
    %v1619 = vmul.f32 %v1608, %v1615
    %s1620 = scalar_lea.vmem %s9, 3
    %v1621 = vld [vmem:[%s1620] sm:$0x1]
    %v1623 = vlaneseq
    %v1624 = vshrl.u32 %v1623, 7
    %v1625 = vsub.s32 0, %v1624
    %v1626 = vrot.slane %v1621, %v1625
    %v1628 = vadd.f32 %v1617, %v1626
    %v1629 = vadd.f32 %v1618, %v1626
    %v1630 = vadd.f32 %v1619, %v1626
    %v1631 = vmax.f32 %v1628, 0.0
    %v1632 = vmax.f32 %v1629, 0.0
    %v1633 = vmax.f32 %v1630, 0.0
    %1634 = vst.msk [vmem:[#allocation8] sm:$0xff] %vm101, %v1568
    %1635 = vst.msk [vmem:[#allocation8 + $0x8] sm:$0xff] %vm101, %v1569
    %1636 = vst.msk [vmem:[#allocation9] sm:$0xff] %vm101, %v1631
    %1637 = vst.msk [vmem:[#allocation9 + $0x8] sm:$0xff] %vm101, %v1632
    %1638 = vst.msk [vmem:[#allocation9 + $0x10] sm:$0xff] %vm101, %v1633
    // Predicated region
    $region54: #{tpu_custom_call.1} parent=1 // pred_check
      _
    $region55: #{tpu_custom_call.1} parent=1 // pred_check_branch
      %1640 = sbr.rel (0) target = $region57
    $region56: #{tpu_custom_call.1} parent=1 // pred_region
      %s1642 = ssub.s32 256, 256
      %1643 = vsyncadd [#allocation4], %s1642
      %s1644 = sshll.u32 [#allocation8], 4
      %s1645 = int_to_ptr.vmem [resolvable:$true] %s1644
      %1650 = dma.vmem_to_hbm [thread:$0]  %s1645, 256, %s10, [#allocation4], 128, 128, 8
    $region57: #{tpu_custom_call.1} parent=1 // pred_fallthru
      _
    // Predicated region
    $region58: #{tpu_custom_call.1} parent=1 // pred_check
      _
    $region59: #{tpu_custom_call.1} parent=1 // pred_check_branch
      %1652 = sbr.rel (0) target = $region61
    $region60: #{tpu_custom_call.1} parent=1 // pred_region
      %s1654 = ssub.s32 384, 384
      %1655 = vsyncadd [#allocation10], %s1654
      %s1656 = sshll.u32 [#allocation9], 4
      %s1657 = int_to_ptr.vmem [resolvable:$true] %s1656
      %1662 = dma.vmem_to_hbm [thread:$0]  %s1657, 384, %s11, [#allocation10], 128, 128, 8
    $region61: #{tpu_custom_call.1} parent=1 // pred_fallthru
      _
    // Predicated region
    $region62: #{tpu_custom_call.1} parent=1 // pred_check
      _
    $region63: #{tpu_custom_call.1} parent=1 // pred_check_branch
      %1664 = sbr.rel (0) target = $region65
    $region64: #{tpu_custom_call.1} parent=1 // pred_region
      %1665 = dma.done [#allocation4], 256
    $region65: #{tpu_custom_call.1} parent=1 // pred_fallthru
      _
    // Predicated region
    $region66: #{tpu_custom_call.1} parent=1 // pred_check
      _
    $region67: #{tpu_custom_call.1} parent=1 // pred_check_branch
      %1667 = sbr.rel (0) target = $region69
    $region68: #{tpu_custom_call.1} parent=1 // pred_region
      %1668 = dma.done [#allocation10], 384
    $region69: #{tpu_custom_call.1} parent=1 // pred_fallthru
      _
    %1669 = vsyncpa [#allocation3], 1
    %1670 = vsyncpa [#allocation6], 1
    %1671 = vsyncpa [#allocation4], 1
    %1672 = vsyncpa [#allocation10], 1

</llo_original>
